<compile_context>
chip_gen: v6e
topology: v6e:2x2x1
jax: 0.10.0
libtpu: 0.0.40
codegen_flags: <defaults>
</compile_context>

<pallas_src>
import jax
import jax.numpy as jnp
from jax.experimental import pallas as pl
from jax.experimental.pallas import tpu as pltpu


def _round_up(x, m):
    return ((x + m - 1) // m) * m


def _make_kernel(n_total, n_tile, n_pad):
    """Build the kernel closure over the static point-padding parameters."""
    mask_needed = (n_pad != n_total)

    def kernel(pts_ref,
               w1_ref, b1_ref, w2_ref, b2_ref, w3_ref, b3_ref,
               w4_ref, b4_ref, w5_ref, b5_ref,
               out_ref, gmax_ref):
        n = pl.program_id(1)
        n_last = pl.num_programs(1) - 1
        tb, nt, cin = pts_ref.shape
        c3 = w3_ref.shape[1]

        # Running-max accumulator over point tiles: init at first tile.
        @pl.when(n == 0)
        def _():
            gmax_ref[...] = jnp.full(gmax_ref.shape, -jnp.inf,
                                     dtype=gmax_ref.dtype)

        # --- mlp1 on (TB*N_TILE, .) slabs: Linear+ReLU, Linear+ReLU, Linear
        x = pts_ref[...].reshape(tb * nt, cin)                    # bf16
        h = jnp.dot(x, w1_ref[...],
                    preferred_element_type=jnp.float32) + b1_ref[...]
        h = jnp.maximum(h, 0.0).astype(jnp.bfloat16)              # (M, 64)
        h = jnp.dot(h, w2_ref[...],
                    preferred_element_type=jnp.float32) + b2_ref[...]
        h = jnp.maximum(h, 0.0).astype(jnp.bfloat16)              # (M, 128)
        h = jnp.dot(h, w3_ref[...],
                    preferred_element_type=jnp.float32) + b3_ref[...]
        h = h.reshape(tb, nt, c3)                                 # (TB,NT,256) f32

        # Mask padded point rows so they never win the max.
        if mask_needed:
            local = jax.lax.broadcasted_iota(jnp.int32, (tb, nt, c3), 1)
            valid = n_total - n * n_tile
            h = jnp.where(local < valid, h, -jnp.inf)

        # AdaptiveMaxPool1d(1): max over points (sublane reduce, channels on lanes).
        gmax_ref[...] = jnp.maximum(gmax_ref[...], jnp.max(h, axis=1))

        # --- fc head, once per batch block, after the last point tile.
        @pl.when(n == n_last)
        def _():
            g = gmax_ref[...].astype(jnp.bfloat16)                # (TB, 256)
            f = jnp.dot(g, w4_ref[...],
                        preferred_element_type=jnp.float32) + b4_ref[...]
            f = jnp.maximum(f, 0.0).astype(jnp.bfloat16)          # (TB, 128)
            o = jnp.dot(f, w5_ref[...],
                        preferred_element_type=jnp.float32) + b5_ref[...]
            out_ref[...] = o.astype(out_ref.dtype)                # (TB, OUT_PAD)

    return kernel


def pointnet_feature_extractor(points, params, *, tb=8, n_tile=None,
                               vmem_limit_cap=48 << 20):
    """points: [B, N, C_in] float32 -> [B, output_dim] float32."""
    B, N, C_in = points.shape
    (w1, b1), (w2, b2), (w3, b3), (w4, b4), (w5, b5) = params
    out_dim = w5.shape[1]
    c1, c2, c3, c4 = w1.shape[1], w2.shape[1], w3.shape[1], w4.shape[1]

    # --- static tiling decisions ------------------------------------------
    cin_pad = _round_up(C_in, 8)              # lane-friendly K for layer 1
    out_pad = _round_up(out_dim, 128)         # lane-dense output stores

    tb = max(1, min(tb, B))
    b_pad = _round_up(B, tb)

    if n_tile is None:
        n_tile = min(_round_up(N, 8), 512)    # cap activation slab per step
    n_tile = _round_up(min(n_tile, _round_up(N, 8)), 8)
    n_pad = _round_up(N, n_tile)

    nb = b_pad // tb
    nn = n_pad // n_tile

    # --- pad / cast inputs & params (bf16 weights, f32 biases) --------------
    pts = jnp.zeros((b_pad, n_pad, cin_pad), jnp.bfloat16)
    pts = pts.at[:B, :N, :C_in].set(points.astype(jnp.bfloat16))

    w1p = jnp.zeros((cin_pad, c1), jnp.bfloat16).at[:C_in].set(
        w1.astype(jnp.bfloat16))
    w2b = w2.astype(jnp.bfloat16)
    w3b = w3.astype(jnp.bfloat16)
    w4b = w4.astype(jnp.bfloat16)
    w5p = jnp.zeros((w5.shape[0], out_pad), jnp.bfloat16).at[:, :out_dim].set(
        w5.astype(jnp.bfloat16))

    b1f = b1.astype(jnp.float32)
    b2f = b2.astype(jnp.float32)
    b3f = b3.astype(jnp.float32)
    b4f = b4.astype(jnp.float32)
    b5p = jnp.zeros((1, out_pad), jnp.float32).at[:, :out_dim].set(
        b5.astype(jnp.float32))

    def wspec(shape):
        return pl.BlockSpec(shape, lambda b, n: (0,) * len(shape))

    # --- explicit VMEM budget (cap keeps it legal on v7x's 64 MiB) ----------
    weight_bytes = 2 * sum(int(a.size) * a.dtype.itemsize
                           for a in (w1p, b1f, w2b, b2f, w3b, b3f,
                                     w4b, b4f, w5p, b5p))
    pts_bytes = 2 * tb * n_tile * cin_pad * 2
    act_bytes = tb * n_tile * (c1 + c2 + c3) * 6      # f32 + bf16 copies
    out_bytes = 2 * tb * out_pad * 4
    scratch_bytes = tb * c3 * 4
    est = weight_bytes + pts_bytes + act_bytes + out_bytes + scratch_bytes
    vmem_limit = int(min(max(est + (8 << 20), 16 << 20), vmem_limit_cap))

    kernel = _make_kernel(N, n_tile, n_pad)

    out = pl.pallas_call(
        kernel,
        out_shape=jax.ShapeDtypeStruct((b_pad, out_pad), jnp.float32),
        grid=(nb, nn),
        in_specs=[
            pl.BlockSpec((tb, n_tile, cin_pad), lambda b, n: (b, n, 0)),
            wspec(w1p.shape), wspec(b1f.shape),
            wspec(w2b.shape), wspec(b2f.shape),
            wspec(w3b.shape), wspec(b3f.shape),
            wspec(w4b.shape), wspec(b4f.shape),
            wspec(w5p.shape), wspec(b5p.shape),
        ],
        out_specs=pl.BlockSpec((tb, out_pad), lambda b, n: (b, 0)),
        scratch_shapes=[pltpu.VMEM((tb, c3), jnp.float32)],
        compiler_params=pltpu.CompilerParams(
            dimension_semantics=("parallel", "arbitrary"),
            vmem_limit_bytes=vmem_limit),
    )(pts, w1p, b1f, w2b, b2f, w3b, b3f, w4b, b4f, w5p, b5p)

    return out[:B, :out_dim]


def init_params(key, input_dim=3, output_dim=64):
    """Deterministic synthetic Linear params; weights stored as [in, out]."""
    dims = [(input_dim, 64), (64, 128), (128, 256), (256, 128),
            (128, output_dim)]
    params = []
    for i, (d_in, d_out) in enumerate(dims):
        kw, kb = jax.random.split(jax.random.fold_in(key, i))
        scale = 1.0 / jnp.sqrt(jnp.float32(d_in))
        w = jax.random.uniform(kw, (d_in, d_out), jnp.float32, -scale, scale)
        b = jax.random.uniform(kb, (1, d_out), jnp.float32, -scale, scale)
        params.append((w, b))
    return params


def pointnet_ref(points, params):
    """Pure-JAX f32 reference of the PyTorch forward pass."""
    (w1, b1), (w2, b2), (w3, b3), (w4, b4), (w5, b5) = params
    x = jnp.maximum(points @ w1 + b1, 0.0)
    x = jnp.maximum(x @ w2 + b2, 0.0)
    x = x @ w3 + b3                     # (B, N, 256)
    x = jnp.max(x, axis=1)              # (B, 256)  == AdaptiveMaxPool1d(1)
    x = jnp.maximum(x @ w4 + b4[0], 0.0)
    return x @ w5 + b5[0]               # (B, output_dim)


def pointnet_ref_bf16(points, params):
    """Reference that mirrors the kernel's bf16-input / f32-accum numerics."""
    (w1, b1), (w2, b2), (w3, b3), (w4, b4), (w5, b5) = params
    bf = jnp.bfloat16

    def mm(x, w):
        return jnp.dot(x.astype(bf), w.astype(bf),
                       preferred_element_type=jnp.float32)

    x = points.astype(bf)
    h = jnp.maximum(mm(x, w1) + b1, 0.0)
    h = jnp.maximum(mm(h, w2) + b2, 0.0)
    h = mm(h, w3) + b3
    g = jnp.max(h, axis=1)
    f = jnp.maximum(mm(g, w4) + b4[0], 0.0)
    return mm(f, w5) + b5[0]


if __name__ == "__main__":
    key = jax.random.PRNGKey(0)
    k_pts, k_par = jax.random.split(key)

    # Small but representative: exercises batch folding (TB=8, 2 batch steps),
    # point tiling with masking (N=50 -> N_pad=64, 2 point tiles), C_in padding
    # (3 -> 8) and output-lane padding (64 -> 128).
    B, N, C_in, C_out = 12, 50, 3, 64
    points = jax.random.normal(k_pts, (B, N, C_in), jnp.float32)
    params = init_params(k_par, input_dim=C_in, output_dim=C_out)

    out = pointnet_feature_extractor(points, params, tb=8, n_tile=32)
    out = jax.block_until_ready(out)

    ref_bf16 = pointnet_ref_bf16(points, params)
    ref_f32 = pointnet_ref(points, params)

    assert out.shape == (B, C_out)
    assert jnp.allclose(out, ref_bf16, atol=5e-3, rtol=5e-3), (
        float(jnp.max(jnp.abs(out - ref_bf16))))
    assert jnp.allclose(out, ref_f32, atol=1e-1, rtol=1e-1), (
        float(jnp.max(jnp.abs(out - ref_f32))))

    print("KERNEL_OK")
</pallas_src>

<mosaic_0001>
module attributes {stable_mosaic.version = 11 : i64} {
  func.func @kernel(%arg0: i32, %arg1: i32, %arg2: memref<8x32x8xbf16, #tpu.memory_space<vmem>>, %arg3: memref<8x64xbf16, #tpu.memory_space<vmem>>, %arg4: memref<1x64xf32, #tpu.memory_space<vmem>>, %arg5: memref<64x128xbf16, #tpu.memory_space<vmem>>, %arg6: memref<1x128xf32, #tpu.memory_space<vmem>>, %arg7: memref<128x256xbf16, #tpu.memory_space<vmem>>, %arg8: memref<1x256xf32, #tpu.memory_space<vmem>>, %arg9: memref<256x128xbf16, #tpu.memory_space<vmem>>, %arg10: memref<1x128xf32, #tpu.memory_space<vmem>>, %arg11: memref<128x128xbf16, #tpu.memory_space<vmem>>, %arg12: memref<1x128xf32, #tpu.memory_space<vmem>>, %arg13: memref<8x128xf32, #tpu.memory_space<vmem>>, %arg14: memref<8x256xf32, #tpu.memory_space<vmem>>) attributes {dimension_semantics = [#tpu.dimension_semantics<parallel>, #tpu.dimension_semantics<arbitrary>], iteration_bounds = array<i64: 2, 2>, scalar_prefetch = 0 : i64, scratch_operands = 1 : i64, tpu.core_type = #tpu.core_type<tc>, window_params = [{transform_indices = @transform_0, window_bounds = array<i64: 8, 32, 8>}, {pipeline_mode = #tpu.pipeline_mode<synchronous>, transform_indices = @transform_1, window_bounds = array<i64: 8, 64>}, {pipeline_mode = #tpu.pipeline_mode<synchronous>, transform_indices = @transform_2, window_bounds = array<i64: 1, 64>}, {pipeline_mode = #tpu.pipeline_mode<synchronous>, transform_indices = @transform_3, window_bounds = array<i64: 64, 128>}, {pipeline_mode = #tpu.pipeline_mode<synchronous>, transform_indices = @transform_4, window_bounds = array<i64: 1, 128>}, {pipeline_mode = #tpu.pipeline_mode<synchronous>, transform_indices = @transform_5, window_bounds = array<i64: 128, 256>}, {pipeline_mode = #tpu.pipeline_mode<synchronous>, transform_indices = @transform_6, window_bounds = array<i64: 1, 256>}, {pipeline_mode = #tpu.pipeline_mode<synchronous>, transform_indices = @transform_7, window_bounds = array<i64: 256, 128>}, {pipeline_mode = #tpu.pipeline_mode<synchronous>, transform_indices = @transform_8, window_bounds = array<i64: 1, 128>}, {pipeline_mode = #tpu.pipeline_mode<synchronous>, transform_indices = @transform_9, window_bounds = array<i64: 128, 128>}, {pipeline_mode = #tpu.pipeline_mode<synchronous>, transform_indices = @transform_10, window_bounds = array<i64: 1, 128>}, {transform_indices = @transform_11, window_bounds = array<i64: 8, 128>}]} {
    %c0_i32 = arith.constant 0 : i32
    %0 = arith.cmpi eq, %arg1, %c0_i32 : i32
    %1 = arith.extui %0 : i1 to i32
    %c0_i32_0 = arith.constant 0 : i32
    %2 = arith.cmpi ne, %1, %c0_i32_0 : i32
    scf.if %2 {
      %cst_26 = arith.constant 0xFF800000 : f32
      %41 = vector.broadcast %cst_26 : f32 to vector<8x256xf32>
      %c0_27 = arith.constant 0 : index
      %c0_28 = arith.constant 0 : index
      %42 = vector.load %arg14[%c0_27, %c0_28] : memref<8x256xf32, #tpu.memory_space<vmem>>, vector<8x256xf32>
      tpu.vector_store %arg14[%c0_27, %c0_28], %41 {strides = array<i32>} : memref<8x256xf32, #tpu.memory_space<vmem>>, vector<8x256xf32>,
    } else {
    }
    %c0 = arith.constant 0 : index
    %c0_1 = arith.constant 0 : index
    %c0_2 = arith.constant 0 : index
    %3 = vector.load %arg2[%c0, %c0_1, %c0_2] : memref<8x32x8xbf16, #tpu.memory_space<vmem>>, vector<8x32x8xbf16>
    %4 = vector.shape_cast %3 : vector<8x32x8xbf16> to vector<256x8xbf16>
    %c0_3 = arith.constant 0 : index
    %c0_4 = arith.constant 0 : index
    %5 = vector.load %arg3[%c0_3, %c0_4] : memref<8x64xbf16, #tpu.memory_space<vmem>>, vector<8x64xbf16>
    %cst = arith.constant dense<0.000000e+00> : vector<256x64xf32>
    %6 = tpu.matmul %4, %5, %cst {dimension_numbers = #tpu.dot_dimension_numbers<[1], [0], [0], [1], [0, 0, 1, 1], [], []>} : vector<256x8xbf16>, vector<8x64xbf16>, vector<256x64xf32> -> vector<256x64xf32>
    %c0_5 = arith.constant 0 : index
    %c0_6 = arith.constant 0 : index
    %7 = vector.load %arg4[%c0_5, %c0_6] : memref<1x64xf32, #tpu.memory_space<vmem>>, vector<1x64xf32>
    %8 = vector.broadcast %7 : vector<1x64xf32> to vector<256x64xf32>
    %9 = arith.addf %6, %8 : vector<256x64xf32>
    %cst_7 = arith.constant 0.000000e+00 : f32
    %10 = vector.broadcast %cst_7 : f32 to vector<256x64xf32>
    %11 = arith.maximumf %9, %10 : vector<256x64xf32>
    %12 = arith.truncf %11 : vector<256x64xf32> to vector<256x64xbf16>
    %c0_8 = arith.constant 0 : index
    %c0_9 = arith.constant 0 : index
    %13 = vector.load %arg5[%c0_8, %c0_9] : memref<64x128xbf16, #tpu.memory_space<vmem>>, vector<64x128xbf16>
    %cst_10 = arith.constant dense<0.000000e+00> : vector<256x128xf32>
    %14 = tpu.matmul %12, %13, %cst_10 {dimension_numbers = #tpu.dot_dimension_numbers<[1], [0], [0], [1], [0, 0, 1, 1], [], []>} : vector<256x64xbf16>, vector<64x128xbf16>, vector<256x128xf32> -> vector<256x128xf32>
    %c0_11 = arith.constant 0 : index
    %c0_12 = arith.constant 0 : index
    %15 = vector.load %arg6[%c0_11, %c0_12] : memref<1x128xf32, #tpu.memory_space<vmem>>, vector<1x128xf32>
    %16 = vector.broadcast %15 : vector<1x128xf32> to vector<256x128xf32>
    %17 = arith.addf %14, %16 : vector<256x128xf32>
    %cst_13 = arith.constant 0.000000e+00 : f32
    %18 = vector.broadcast %cst_13 : f32 to vector<256x128xf32>
    %19 = arith.maximumf %17, %18 : vector<256x128xf32>
    %20 = arith.truncf %19 : vector<256x128xf32> to vector<256x128xbf16>
    %c0_14 = arith.constant 0 : index
    %c0_15 = arith.constant 0 : index
    %21 = vector.load %arg7[%c0_14, %c0_15] : memref<128x256xbf16, #tpu.memory_space<vmem>>, vector<128x256xbf16>
    %cst_16 = arith.constant dense<0.000000e+00> : vector<256x256xf32>
    %22 = tpu.matmul %20, %21, %cst_16 {dimension_numbers = #tpu.dot_dimension_numbers<[1], [0], [0], [1], [0, 0, 1, 1], [], []>} : vector<256x128xbf16>, vector<128x256xbf16>, vector<256x256xf32> -> vector<256x256xf32>
    %c0_17 = arith.constant 0 : index
    %c0_18 = arith.constant 0 : index
    %23 = vector.load %arg8[%c0_17, %c0_18] : memref<1x256xf32, #tpu.memory_space<vmem>>, vector<1x256xf32>
    %24 = vector.broadcast %23 : vector<1x256xf32> to vector<256x256xf32>
    %25 = arith.addf %22, %24 : vector<256x256xf32>
    %26 = vector.shape_cast %25 : vector<256x256xf32> to vector<8x32x256xf32>
    %27 = tpu.iota {dimensions = array<i32: 1>} : vector<8x32x256xi32>
    %c32_i32 = arith.constant 32 : i32
    %28 = arith.muli %arg1, %c32_i32 : i32
    %c50_i32 = arith.constant 50 : i32
    %29 = arith.subi %c50_i32, %28 : i32
    %30 = vector.broadcast %29 : i32 to vector<8x32x256xi32>
    %31 = arith.cmpi slt, %27, %30 : vector<8x32x256xi32>
    %cst_19 = arith.constant 0xFF800000 : f32
    %32 = vector.broadcast %cst_19 : f32 to vector<8x32x256xf32>
    %33 = arith.select %31, %26, %32 : vector<8x32x256xi1>, vector<8x32x256xf32>
    %c0_20 = arith.constant 0 : index
    %c0_21 = arith.constant 0 : index
    %34 = vector.load %arg14[%c0_20, %c0_21] : memref<8x256xf32, #tpu.memory_space<vmem>>, vector<8x256xf32>
    %cst_22 = arith.constant dense<0xFF800000> : vector<8x256xf32>
    %35 = vector.multi_reduction <maximumf>, %33, %cst_22 [1] : vector<8x32x256xf32> to vector<8x256xf32>
    %36 = arith.maximumf %34, %35 : vector<8x256xf32>
    %c0_23 = arith.constant 0 : index
    %c0_24 = arith.constant 0 : index
    %37 = vector.load %arg14[%c0_23, %c0_24] : memref<8x256xf32, #tpu.memory_space<vmem>>, vector<8x256xf32>
    tpu.vector_store %arg14[%c0_23, %c0_24], %36 {strides = array<i32>} : memref<8x256xf32, #tpu.memory_space<vmem>>, vector<8x256xf32>,
    %c1_i32 = arith.constant 1 : i32
    %38 = arith.cmpi eq, %arg1, %c1_i32 : i32
    %39 = arith.extui %38 : i1 to i32
    %c0_i32_25 = arith.constant 0 : i32
    %40 = arith.cmpi ne, %39, %c0_i32_25 : i32
    scf.if %40 {
      %c0_26 = arith.constant 0 : index
      %c0_27 = arith.constant 0 : index
      %41 = vector.load %arg14[%c0_26, %c0_27] : memref<8x256xf32, #tpu.memory_space<vmem>>, vector<8x256xf32>
      %42 = arith.truncf %41 : vector<8x256xf32> to vector<8x256xbf16>
      %c0_28 = arith.constant 0 : index
      %c0_29 = arith.constant 0 : index
      %43 = vector.load %arg9[%c0_28, %c0_29] : memref<256x128xbf16, #tpu.memory_space<vmem>>, vector<256x128xbf16>
      %cst_30 = arith.constant dense<0.000000e+00> : vector<8x128xf32>
      %44 = tpu.matmul %42, %43, %cst_30 {dimension_numbers = #tpu.dot_dimension_numbers<[1], [0], [0], [1], [0, 0, 1, 1], [], []>} : vector<8x256xbf16>, vector<256x128xbf16>, vector<8x128xf32> -> vector<8x128xf32>
      %c0_31 = arith.constant 0 : index
      %c0_32 = arith.constant 0 : index
      %45 = vector.load %arg10[%c0_31, %c0_32] : memref<1x128xf32, #tpu.memory_space<vmem>>, vector<1x128xf32>
      %46 = vector.broadcast %45 : vector<1x128xf32> to vector<8x128xf32>
      %47 = arith.addf %44, %46 : vector<8x128xf32>
      %cst_33 = arith.constant 0.000000e+00 : f32
      %48 = vector.broadcast %cst_33 : f32 to vector<8x128xf32>
      %49 = arith.maximumf %47, %48 : vector<8x128xf32>
      %50 = arith.truncf %49 : vector<8x128xf32> to vector<8x128xbf16>
      %c0_34 = arith.constant 0 : index
      %c0_35 = arith.constant 0 : index
      %51 = vector.load %arg11[%c0_34, %c0_35] : memref<128x128xbf16, #tpu.memory_space<vmem>>, vector<128x128xbf16>
      %cst_36 = arith.constant dense<0.000000e+00> : vector<8x128xf32>
      %52 = tpu.matmul %50, %51, %cst_36 {dimension_numbers = #tpu.dot_dimension_numbers<[1], [0], [0], [1], [0, 0, 1, 1], [], []>} : vector<8x128xbf16>, vector<128x128xbf16>, vector<8x128xf32> -> vector<8x128xf32>
      %c0_37 = arith.constant 0 : index
      %c0_38 = arith.constant 0 : index
      %53 = vector.load %arg12[%c0_37, %c0_38] : memref<1x128xf32, #tpu.memory_space<vmem>>, vector<1x128xf32>
      %54 = vector.broadcast %53 : vector<1x128xf32> to vector<8x128xf32>
      %55 = arith.addf %52, %54 : vector<8x128xf32>
      %c0_39 = arith.constant 0 : index
      %c0_40 = arith.constant 0 : index
      %56 = vector.load %arg13[%c0_39, %c0_40] : memref<8x128xf32, #tpu.memory_space<vmem>>, vector<8x128xf32>
      tpu.vector_store %arg13[%c0_39, %c0_40], %55 {strides = array<i32>} : memref<8x128xf32, #tpu.memory_space<vmem>>, vector<8x128xf32>,
    } else {
    }
    return
  }
  func.func @transform_0(%arg0: i32, %arg1: i32) -> (i32, i32, i32) {
    %c0_i32 = arith.constant 0 : i32
    %c0_i32_0 = arith.constant 0 : i32
    return %arg0, %arg1, %c0_i32 : i32, i32, i32
  }
  func.func @transform_1(%arg0: i32, %arg1: i32) -> (i32, i32) {
    %c0_i32 = arith.constant 0 : i32
    %c0_i32_0 = arith.constant 0 : i32
    %c0_i32_1 = arith.constant 0 : i32
    return %c0_i32, %c0_i32_0 : i32, i32
  }
  func.func @transform_2(%arg0: i32, %arg1: i32) -> (i32, i32) {
    %c0_i32 = arith.constant 0 : i32
    %c0_i32_0 = arith.constant 0 : i32
    %c0_i32_1 = arith.constant 0 : i32
    return %c0_i32, %c0_i32_0 : i32, i32
  }
  func.func @transform_3(%arg0: i32, %arg1: i32) -> (i32, i32) {
    %c0_i32 = arith.constant 0 : i32
    %c0_i32_0 = arith.constant 0 : i32
    %c0_i32_1 = arith.constant 0 : i32
    return %c0_i32, %c0_i32_0 : i32, i32
  }
  func.func @transform_4(%arg0: i32, %arg1: i32) -> (i32, i32) {
    %c0_i32 = arith.constant 0 : i32
    %c0_i32_0 = arith.constant 0 : i32
    %c0_i32_1 = arith.constant 0 : i32
    return %c0_i32, %c0_i32_0 : i32, i32
  }
  func.func @transform_5(%arg0: i32, %arg1: i32) -> (i32, i32) {
    %c0_i32 = arith.constant 0 : i32
    %c0_i32_0 = arith.constant 0 : i32
    %c0_i32_1 = arith.constant 0 : i32
    return %c0_i32, %c0_i32_0 : i32, i32
  }
  func.func @transform_6(%arg0: i32, %arg1: i32) -> (i32, i32) {
    %c0_i32 = arith.constant 0 : i32
    %c0_i32_0 = arith.constant 0 : i32
    %c0_i32_1 = arith.constant 0 : i32
    return %c0_i32, %c0_i32_0 : i32, i32
  }
  func.func @transform_7(%arg0: i32, %arg1: i32) -> (i32, i32) {
    %c0_i32 = arith.constant 0 : i32
    %c0_i32_0 = arith.constant 0 : i32
    %c0_i32_1 = arith.constant 0 : i32
    return %c0_i32, %c0_i32_0 : i32, i32
  }
  func.func @transform_8(%arg0: i32, %arg1: i32) -> (i32, i32) {
    %c0_i32 = arith.constant 0 : i32
    %c0_i32_0 = arith.constant 0 : i32
    %c0_i32_1 = arith.constant 0 : i32
    return %c0_i32, %c0_i32_0 : i32, i32
  }
  func.func @transform_9(%arg0: i32, %arg1: i32) -> (i32, i32) {
    %c0_i32 = arith.constant 0 : i32
    %c0_i32_0 = arith.constant 0 : i32
    %c0_i32_1 = arith.constant 0 : i32
    return %c0_i32, %c0_i32_0 : i32, i32
  }
  func.func @transform_10(%arg0: i32, %arg1: i32) -> (i32, i32) {
    %c0_i32 = arith.constant 0 : i32
    %c0_i32_0 = arith.constant 0 : i32
    %c0_i32_1 = arith.constant 0 : i32
    return %c0_i32, %c0_i32_0 : i32, i32
  }
  func.func @transform_11(%arg0: i32, %arg1: i32) -> (i32, i32) {
    %c0_i32 = arith.constant 0 : i32
    %c0_i32_0 = arith.constant 0 : i32
    return %arg0, %c0_i32 : i32, i32
  }
}

</mosaic_0001>

<llo_original>
// kernel: tpu_custom_call.1
$region0: #{tpu_custom_call.1}
  #allocation0 [shape = 'u32[]', space=smem, size = 0x4, offset = 0x4, fixed_abs, tag = 'smem constant byte address 0x4 - core index']
  #allocation1 [shape = 'u32[144,128]{1,0:T(1,128)}', space=vmem, size = 0x12000, scoped, tag = 'internal scratch']
  #allocation2 [shape = 'f32[8,256]{1,0:T(8,128)}', space=vmem, size = 0x2000, scoped, tag = 'scratch operand']
  %s0 = inlined_call_operand.vmem [shape: bf16[16,64,8], index: 0, kind: input, shape index: {}]
  %s1 = inlined_call_operand.vmem [shape: bf16[8,64], index: 1, kind: input, shape index: {}]
  %s2 = inlined_call_operand.vmem [shape: f32[1,64], index: 2, kind: input, shape index: {}]
  %s3 = inlined_call_operand.vmem [shape: bf16[64,128], index: 3, kind: input, shape index: {}]
  %s4 = inlined_call_operand.vmem [shape: f32[1,128], index: 4, kind: input, shape index: {}]
  %s5 = inlined_call_operand.vmem [shape: bf16[128,256], index: 5, kind: input, shape index: {}]
  %s6 = inlined_call_operand.vmem [shape: f32[1,256], index: 6, kind: input, shape index: {}]
  %s7 = inlined_call_operand.vmem [shape: bf16[256,128], index: 7, kind: input, shape index: {}]
  %s8 = inlined_call_operand.vmem [shape: f32[1,128], index: 8, kind: input, shape index: {}]
  %s9 = inlined_call_operand.vmem [shape: bf16[128,128], index: 9, kind: input, shape index: {}]
  %s10 = inlined_call_operand.vmem [shape: f32[1,128], index: 10, kind: input, shape index: {}]
  %s11 = inlined_call_operand.hbm [shape: f32[16,128], index: 11, kind: output, shape index: {}]
  %s12 = sld [smem:[#allocation0]]
  $region126: #{tpu_custom_call.1} parent=0
    _
  %s14 = ssub.s32 1, %s12
  %s15 = scalar_select 0, %s14, %s12
  $region1: #{tpu_custom_call.1} parent=0
    #allocation3 [shape = 'u8[131072]{0}', space=vmem, size = 0x20000, scoped, tag = 'input window, operand 0']
    #allocation4 [shape = 'u8[8192]{0}', space=vmem, size = 0x2000, scoped, tag = 'output window, operand 0']
    #allocation5 [shape = 's32[2]{0}', space=sflag, size = 0x8, scoped, tag = 'scoped memory for tpu_custom_call.1']
    %16 = vsyncpa [#allocation5], 0
    %s17 = scalar_lea.sflag [#allocation5], 1
    %18 = vsyncpa %s17, 0
    loop: start=0, step=1, limit=6
    $region2: #{tpu_custom_call.1} parent=1 // loop_pre_header
      _
    $region3: #{tpu_custom_call.1} parent=1 // loop_header
      %s20 = sphi 0, %s24
      %p21 = scmp.ge.s32.totalorder %s20, 6
      %s27 = sphi 0, %s39
      %s28 = sphi 0, %s35
      %s29 = sphi 0, %s27
      %s30 = sphi 0, %s28
      %s31 = sphi 0, %s29
      %s32 = sphi 0, %s30
      %s44 = sphi 0, %s46
      %s47 = sphi 0, %s44
      %s48 = sphi 0, %s47
      %s64 = sphi 0, %s48
      %s68 = sphi 0, %s68
      %s70 = sphi 0, %s68
      %s71 = sphi 0, %s70
      %s85 = sphi 0, %s71
      %s89 = sphi 0, %s89
      %s91 = sphi 0, %s89
      %s92 = sphi 0, %s91
      %s106 = sphi 0, %s92
      %s110 = sphi 0, %s110
      %s112 = sphi 0, %s110
      %s113 = sphi 0, %s112
      %s127 = sphi 0, %s113
      %s131 = sphi 0, %s131
      %s133 = sphi 0, %s131
      %s134 = sphi 0, %s133
      %s148 = sphi 0, %s134
      %s152 = sphi 0, %s152
      %s154 = sphi 0, %s152
      %s155 = sphi 0, %s154
      %s169 = sphi 0, %s155
      %s173 = sphi 0, %s173
      %s175 = sphi 0, %s173
      %s176 = sphi 0, %s175
      %s190 = sphi 0, %s176
      %s194 = sphi 0, %s194
      %s196 = sphi 0, %s194
      %s197 = sphi 0, %s196
      %s211 = sphi 0, %s197
      %s215 = sphi 0, %s215
      %s217 = sphi 0, %s215
      %s218 = sphi 0, %s217
      %s232 = sphi 0, %s218
      %s236 = sphi 0, %s236
      %s238 = sphi 0, %s236
      %s239 = sphi 0, %s238
      %s253 = sphi 0, %s239
      %s257 = sphi 0, %s257
      %s259 = sphi 0, %s257
      %s260 = sphi 0, %s259
      %s274 = sphi 0, %s260
      %s280 = sphi 0, %s282
      %s283 = sphi 0, %s280
      %s284 = sphi 0, %s283
      %s300 = sphi 0, %s284
    $region4: #{tpu_custom_call.1} parent=1 // loop_header_branch
      %23 = sbr.rel (%p21) target = $region8
    $region5: #{tpu_custom_call.1} parent=1 // loop_body
      %s25 = ssub.s32 %s20, 1
      %s26 = ssub.s32 %s20, 2
      %s33 = sadd.s32 1, %s28
      %p34 = scmp.ge.s32.totalorder %s33, 2
      %s35 = scalar_select %p34, 0, %s33
      %s36 = sadd.s32 1, %s27
      %s37 = scalar_select %p34, %s36, %s27
      %p38 = scmp.ge.s32.totalorder %s37, 2
      %s39 = scalar_select %p38, 0, %s37
      %s40 = ssub.s32 %s27, %s39
      %s41 = ssub.s32 %s28, %s35
      %s42 = sor.u32 %s40, %s41
      %p43 = scmp.eq.s32.totalorder %s42, 0
      %s45 = sadd.s32 %s44, 1
      %s46 = scalar_select %p43, %s44, %s45
      %p49 = pneg %p43
      %p50 = scmp.eq.s32.totalorder %s20, 3
      %p51 = por %p49, %p50
      %p52 = scmp.ne.s32.totalorder %s44, %s47
      %p53 = scmp.eq.s32.totalorder %s20, 0
      %p54 = por %p52, %p53
      %p55 = scmp.ne.s32.totalorder %s44, %s47
      %p56 = scmp.eq.s32.totalorder %s25, 3
      %p57 = por %p55, %p56
      %p58 = scmp.ne.s32.totalorder %s47, %s48
      %p59 = scmp.eq.s32.totalorder %s25, 0
      %p60 = por %p58, %p59
      %p61 = scmp.ne.s32.totalorder %s47, %s48
      %p62 = scmp.eq.s32.totalorder %s26, 3
      %p63 = por %p61, %p62
      %p65 = scmp.ne.s32.totalorder %s48, %s64
      %p66 = scmp.eq.s32.totalorder %s26, 0
      %p67 = por %p65, %p66
      %s69 = sadd.s32 %s68, 1
      %p72 = scmp.eq.s32.totalorder %s20, 3
      %p73 = scmp.ne.s32.totalorder %s68, %s70
      %p74 = scmp.eq.s32.totalorder %s20, 0
      %p75 = por %p73, %p74
      %p76 = scmp.ne.s32.totalorder %s68, %s70
      %p77 = scmp.eq.s32.totalorder %s25, 3
      %p78 = por %p76, %p77
      %p79 = scmp.ne.s32.totalorder %s70, %s71
      %p80 = scmp.eq.s32.totalorder %s25, 0
      %p81 = por %p79, %p80
      %p82 = scmp.ne.s32.totalorder %s70, %s71
      %p83 = scmp.eq.s32.totalorder %s26, 3
      %p84 = por %p82, %p83
      %p86 = scmp.ne.s32.totalorder %s71, %s85
      %p87 = scmp.eq.s32.totalorder %s26, 0
      %p88 = por %p86, %p87
      %s90 = sadd.s32 %s89, 1
      %p93 = scmp.eq.s32.totalorder %s20, 3
      %p94 = scmp.ne.s32.totalorder %s89, %s91
      %p95 = scmp.eq.s32.totalorder %s20, 0
      %p96 = por %p94, %p95
      %p97 = scmp.ne.s32.totalorder %s89, %s91
      %p98 = scmp.eq.s32.totalorder %s25, 3
      %p99 = por %p97, %p98
      %p100 = scmp.ne.s32.totalorder %s91, %s92
      %p101 = scmp.eq.s32.totalorder %s25, 0
      %p102 = por %p100, %p101
      %p103 = scmp.ne.s32.totalorder %s91, %s92
      %p104 = scmp.eq.s32.totalorder %s26, 3
      %p105 = por %p103, %p104
      %p107 = scmp.ne.s32.totalorder %s92, %s106
      %p108 = scmp.eq.s32.totalorder %s26, 0
      %p109 = por %p107, %p108
      %s111 = sadd.s32 %s110, 1
      %p114 = scmp.eq.s32.totalorder %s20, 3
      %p115 = scmp.ne.s32.totalorder %s110, %s112
      %p116 = scmp.eq.s32.totalorder %s20, 0
      %p117 = por %p115, %p116
      %p118 = scmp.ne.s32.totalorder %s110, %s112
      %p119 = scmp.eq.s32.totalorder %s25, 3
      %p120 = por %p118, %p119
      %p121 = scmp.ne.s32.totalorder %s112, %s113
      %p122 = scmp.eq.s32.totalorder %s25, 0
      %p123 = por %p121, %p122
      %p124 = scmp.ne.s32.totalorder %s112, %s113
      %p125 = scmp.eq.s32.totalorder %s26, 3
      %p126 = por %p124, %p125
      %p128 = scmp.ne.s32.totalorder %s113, %s127
      %p129 = scmp.eq.s32.totalorder %s26, 0
      %p130 = por %p128, %p129
      %s132 = sadd.s32 %s131, 1
      %p135 = scmp.eq.s32.totalorder %s20, 3
      %p136 = scmp.ne.s32.totalorder %s131, %s133
      %p137 = scmp.eq.s32.totalorder %s20, 0
      %p138 = por %p136, %p137
      %p139 = scmp.ne.s32.totalorder %s131, %s133
      %p140 = scmp.eq.s32.totalorder %s25, 3
      %p141 = por %p139, %p140
      %p142 = scmp.ne.s32.totalorder %s133, %s134
      %p143 = scmp.eq.s32.totalorder %s25, 0
      %p144 = por %p142, %p143
      %p145 = scmp.ne.s32.totalorder %s133, %s134
      %p146 = scmp.eq.s32.totalorder %s26, 3
      %p147 = por %p145, %p146
      %p149 = scmp.ne.s32.totalorder %s134, %s148
      %p150 = scmp.eq.s32.totalorder %s26, 0
      %p151 = por %p149, %p150
      %s153 = sadd.s32 %s152, 1
      %p156 = scmp.eq.s32.totalorder %s20, 3
      %p157 = scmp.ne.s32.totalorder %s152, %s154
      %p158 = scmp.eq.s32.totalorder %s20, 0
      %p159 = por %p157, %p158
      %p160 = scmp.ne.s32.totalorder %s152, %s154
      %p161 = scmp.eq.s32.totalorder %s25, 3
      %p162 = por %p160, %p161
      %p163 = scmp.ne.s32.totalorder %s154, %s155
      %p164 = scmp.eq.s32.totalorder %s25, 0
      %p165 = por %p163, %p164
      %p166 = scmp.ne.s32.totalorder %s154, %s155
      %p167 = scmp.eq.s32.totalorder %s26, 3
      %p168 = por %p166, %p167
      %p170 = scmp.ne.s32.totalorder %s155, %s169
      %p171 = scmp.eq.s32.totalorder %s26, 0
      %p172 = por %p170, %p171
      %s174 = sadd.s32 %s173, 1
      %p177 = scmp.eq.s32.totalorder %s20, 3
      %p178 = scmp.ne.s32.totalorder %s173, %s175
      %p179 = scmp.eq.s32.totalorder %s20, 0
      %p180 = por %p178, %p179
      %p181 = scmp.ne.s32.totalorder %s173, %s175
      %p182 = scmp.eq.s32.totalorder %s25, 3
      %p183 = por %p181, %p182
      %p184 = scmp.ne.s32.totalorder %s175, %s176
      %p185 = scmp.eq.s32.totalorder %s25, 0
      %p186 = por %p184, %p185
      %p187 = scmp.ne.s32.totalorder %s175, %s176
      %p188 = scmp.eq.s32.totalorder %s26, 3
      %p189 = por %p187, %p188
      %p191 = scmp.ne.s32.totalorder %s176, %s190
      %p192 = scmp.eq.s32.totalorder %s26, 0
      %p193 = por %p191, %p192
      %s195 = sadd.s32 %s194, 1
      %p198 = scmp.eq.s32.totalorder %s20, 3
      %p199 = scmp.ne.s32.totalorder %s194, %s196
      %p200 = scmp.eq.s32.totalorder %s20, 0
      %p201 = por %p199, %p200
      %p202 = scmp.ne.s32.totalorder %s194, %s196
      %p203 = scmp.eq.s32.totalorder %s25, 3
      %p204 = por %p202, %p203
      %p205 = scmp.ne.s32.totalorder %s196, %s197
      %p206 = scmp.eq.s32.totalorder %s25, 0
      %p207 = por %p205, %p206
      %p208 = scmp.ne.s32.totalorder %s196, %s197
      %p209 = scmp.eq.s32.totalorder %s26, 3
      %p210 = por %p208, %p209
      %p212 = scmp.ne.s32.totalorder %s197, %s211
      %p213 = scmp.eq.s32.totalorder %s26, 0
      %p214 = por %p212, %p213
      %s216 = sadd.s32 %s215, 1
      %p219 = scmp.eq.s32.totalorder %s20, 3
      %p220 = scmp.ne.s32.totalorder %s215, %s217
      %p221 = scmp.eq.s32.totalorder %s20, 0
      %p222 = por %p220, %p221
      %p223 = scmp.ne.s32.totalorder %s215, %s217
      %p224 = scmp.eq.s32.totalorder %s25, 3
      %p225 = por %p223, %p224
      %p226 = scmp.ne.s32.totalorder %s217, %s218
      %p227 = scmp.eq.s32.totalorder %s25, 0
      %p228 = por %p226, %p227
      %p229 = scmp.ne.s32.totalorder %s217, %s218
      %p230 = scmp.eq.s32.totalorder %s26, 3
      %p231 = por %p229, %p230
      %p233 = scmp.ne.s32.totalorder %s218, %s232
      %p234 = scmp.eq.s32.totalorder %s26, 0
      %p235 = por %p233, %p234
      %s237 = sadd.s32 %s236, 1
      %p240 = scmp.eq.s32.totalorder %s20, 3
      %p241 = scmp.ne.s32.totalorder %s236, %s238
      %p242 = scmp.eq.s32.totalorder %s20, 0
      %p243 = por %p241, %p242
      %p244 = scmp.ne.s32.totalorder %s236, %s238
      %p245 = scmp.eq.s32.totalorder %s25, 3
      %p246 = por %p244, %p245
      %p247 = scmp.ne.s32.totalorder %s238, %s239
      %p248 = scmp.eq.s32.totalorder %s25, 0
      %p249 = por %p247, %p248
      %p250 = scmp.ne.s32.totalorder %s238, %s239
      %p251 = scmp.eq.s32.totalorder %s26, 3
      %p252 = por %p250, %p251
      %p254 = scmp.ne.s32.totalorder %s239, %s253
      %p255 = scmp.eq.s32.totalorder %s26, 0
      %p256 = por %p254, %p255
      %s258 = sadd.s32 %s257, 1
      %p261 = scmp.eq.s32.totalorder %s20, 3
      %p262 = scmp.ne.s32.totalorder %s257, %s259
      %p263 = scmp.eq.s32.totalorder %s20, 0
      %p264 = por %p262, %p263
      %p265 = scmp.ne.s32.totalorder %s257, %s259
      %p266 = scmp.eq.s32.totalorder %s25, 3
      %p267 = por %p265, %p266
      %p268 = scmp.ne.s32.totalorder %s259, %s260
      %p269 = scmp.eq.s32.totalorder %s25, 0
      %p270 = por %p268, %p269
      %p271 = scmp.ne.s32.totalorder %s259, %s260
      %p272 = scmp.eq.s32.totalorder %s26, 3
      %p273 = por %p271, %p272
      %p275 = scmp.ne.s32.totalorder %s260, %s274
      %p276 = scmp.eq.s32.totalorder %s26, 0
      %p277 = por %p275, %p276
      %s278 = ssub.s32 %s27, %s39
      %p279 = scmp.eq.s32.totalorder %s278, 0
      %s281 = sadd.s32 %s280, 1
      %s282 = scalar_select %p279, %s280, %s281
      %p285 = pneg %p279
      %p286 = scmp.eq.s32.totalorder %s20, 3
      %p287 = por %p285, %p286
      %p288 = scmp.ne.s32.totalorder %s280, %s283
      %p289 = scmp.eq.s32.totalorder %s20, 0
      %p290 = por %p288, %p289
      %p291 = scmp.ne.s32.totalorder %s280, %s283
      %p292 = scmp.eq.s32.totalorder %s25, 3
      %p293 = por %p291, %p292
      %p294 = scmp.ne.s32.totalorder %s283, %s284
      %p295 = scmp.eq.s32.totalorder %s25, 0
      %p296 = por %p294, %p295
      %p297 = scmp.ne.s32.totalorder %s283, %s284
      %p298 = scmp.eq.s32.totalorder %s26, 3
      %p299 = por %p297, %p298
      %p301 = scmp.ne.s32.totalorder %s284, %s300
      %p302 = scmp.eq.s32.totalorder %s26, 0
      %p303 = por %p301, %p302
      %p304 = scmp.le.s32.totalorder 1, %s20
      %p305 = scmp.lt.s32.totalorder %s20, 5
      %p306 = pnand %p304, %p305
      %p307 = pneg %p306
      // Predicated region
      $region9: #{tpu_custom_call.1} parent=5 // pred_check
        _
      $region10: #{tpu_custom_call.1} parent=5 // pred_check_branch
        %309 = sbr.rel (%p306) target = $region12
      $region11: #{tpu_custom_call.1} parent=5 // pred_region
        %s310 = ssub.s32 %s20, 1
        // Predicated region
        $region13: #{tpu_custom_call.1} parent=11 // pred_check
          %p311 = pneg %p81
        $region14: #{tpu_custom_call.1} parent=11 // pred_check_branch
          %313 = sbr.rel (%p311) target = $region16
        $region15: #{tpu_custom_call.1} parent=11 // pred_region
          _
        $region16: #{tpu_custom_call.1} parent=11 // pred_fallthru
          _
        // Predicated region
        $region17: #{tpu_custom_call.1} parent=11 // pred_check
          %p314 = pneg %p102
        $region18: #{tpu_custom_call.1} parent=11 // pred_check_branch
          %316 = sbr.rel (%p314) target = $region20
        $region19: #{tpu_custom_call.1} parent=11 // pred_region
          _
        $region20: #{tpu_custom_call.1} parent=11 // pred_fallthru
          _
        // Predicated region
        $region21: #{tpu_custom_call.1} parent=11 // pred_check
          %p317 = pneg %p123
        $region22: #{tpu_custom_call.1} parent=11 // pred_check_branch
          %319 = sbr.rel (%p317) target = $region24
        $region23: #{tpu_custom_call.1} parent=11 // pred_region
          _
        $region24: #{tpu_custom_call.1} parent=11 // pred_fallthru
          _
        // Predicated region
        $region25: #{tpu_custom_call.1} parent=11 // pred_check
          %p320 = pneg %p144
        $region26: #{tpu_custom_call.1} parent=11 // pred_check_branch
          %322 = sbr.rel (%p320) target = $region28
        $region27: #{tpu_custom_call.1} parent=11 // pred_region
          _
        $region28: #{tpu_custom_call.1} parent=11 // pred_fallthru
          _
        // Predicated region
        $region29: #{tpu_custom_call.1} parent=11 // pred_check
          %p323 = pneg %p165
        $region30: #{tpu_custom_call.1} parent=11 // pred_check_branch
          %325 = sbr.rel (%p323) target = $region32
        $region31: #{tpu_custom_call.1} parent=11 // pred_region
          _
        $region32: #{tpu_custom_call.1} parent=11 // pred_fallthru
          _
        // Predicated region
        $region33: #{tpu_custom_call.1} parent=11 // pred_check
          %p326 = pneg %p186
        $region34: #{tpu_custom_call.1} parent=11 // pred_check_branch
          %328 = sbr.rel (%p326) target = $region36
        $region35: #{tpu_custom_call.1} parent=11 // pred_region
          _
        $region36: #{tpu_custom_call.1} parent=11 // pred_fallthru
          _
        // Predicated region
        $region37: #{tpu_custom_call.1} parent=11 // pred_check
          %p329 = pneg %p207
        $region38: #{tpu_custom_call.1} parent=11 // pred_check_branch
          %331 = sbr.rel (%p329) target = $region40
        $region39: #{tpu_custom_call.1} parent=11 // pred_region
          _
        $region40: #{tpu_custom_call.1} parent=11 // pred_fallthru
          _
        // Predicated region
        $region41: #{tpu_custom_call.1} parent=11 // pred_check
          %p332 = pneg %p228
        $region42: #{tpu_custom_call.1} parent=11 // pred_check_branch
          %334 = sbr.rel (%p332) target = $region44
        $region43: #{tpu_custom_call.1} parent=11 // pred_region
          _
        $region44: #{tpu_custom_call.1} parent=11 // pred_fallthru
          _
        // Predicated region
        $region45: #{tpu_custom_call.1} parent=11 // pred_check
          %p335 = pneg %p249
        $region46: #{tpu_custom_call.1} parent=11 // pred_check_branch
          %337 = sbr.rel (%p335) target = $region48
        $region47: #{tpu_custom_call.1} parent=11 // pred_region
          _
        $region48: #{tpu_custom_call.1} parent=11 // pred_fallthru
          _
        // Predicated region
        $region49: #{tpu_custom_call.1} parent=11 // pred_check
          %p338 = pneg %p270
        $region50: #{tpu_custom_call.1} parent=11 // pred_check_branch
          %340 = sbr.rel (%p338) target = $region52
        $region51: #{tpu_custom_call.1} parent=11 // pred_region
          _
        $region52: #{tpu_custom_call.1} parent=11 // pred_fallthru
          _
      $region12: #{tpu_custom_call.1} parent=5 // pred_fallthru
        _
      %p341 = scmp.lt.s32.totalorder %s20, 4
      // Predicated region
      $region53: #{tpu_custom_call.1} parent=5 // pred_check
        %p342 = pneg %p341
      $region54: #{tpu_custom_call.1} parent=5 // pred_check_branch
        %344 = sbr.rel (%p342) target = $region56
      $region55: #{tpu_custom_call.1} parent=5 // pred_region
        // Predicated region
        $region57: #{tpu_custom_call.1} parent=55 // pred_check
          %p345 = pneg %p54
        $region58: #{tpu_custom_call.1} parent=55 // pred_check_branch
          %347 = sbr.rel (%p345) target = $region60
        $region59: #{tpu_custom_call.1} parent=55 // pred_region
          %s348 = sand.u32 %s44, 1
          %s349 = sand.u32 %s44, 1
          %s350 = smul.addr %s349, 128
          %s351 = scalar_lea.vmem [#allocation3], %s350
          %s352 = smul.u32 8, %s27
          %s353 = smul.u32 4, %s28
          %s354 = smul.addr %s352, 8
          %s355 = sadd.s32 %s353, %s354
          %s356 = smul.addr %s355, 4
          %s357 = scalar_lea.vmem %s0, %s356
          // Predicated region
          $region61: #{tpu_custom_call.1} parent=59 // pred_check
            _
          $region62: #{tpu_custom_call.1} parent=59 // pred_check_branch
            %359 = sbr.rel (0) target = $region64
          $region63: #{tpu_custom_call.1} parent=59 // pred_region
            // Predicated region
            $region65: #{tpu_custom_call.1} parent=63 // pred_check
              _
            $region66: #{tpu_custom_call.1} parent=63 // pred_check_branch
              %361 = sbr.rel target = $region68
            $region67: #{tpu_custom_call.1} parent=63 // pred_region
              // Predicated region
              $region80: #{tpu_custom_call.1} parent=67 // pred_check
                _
              $region81: #{tpu_custom_call.1} parent=67 // pred_check_branch
                %439 = sbr.rel (0) target = $region83
              $region82: #{tpu_custom_call.1} parent=67 // pred_region
                loop: start=0, step=1, limit=1
                $region84: #{tpu_custom_call.1} parent=82 // loop_pre_header
                  _
                $region85: #{tpu_custom_call.1} parent=82 // loop_header
                  %s441 = sphi 0, %s445
                  %p442 = scmp.ge.s32.totalorder %s441, 1
                  %s446 = sphi %s357, %s357
                  %s447 = sphi %s351, %s351
                $region86: #{tpu_custom_call.1} parent=82 // loop_header_branch
                  %444 = sbr.rel (%p442) target = $region90
                $region87: #{tpu_custom_call.1} parent=82 // loop_body
                  _
                $region88: #{tpu_custom_call.1} parent=82 // loop_footer
                  %s445 = sadd.s32 1, %s441
                $region89: #{tpu_custom_call.1} parent=82 // loop_footer_branch
                  %440 = sbr.rel target = $region85
                $region90: #{tpu_custom_call.1} parent=82 // loop_exit
                  _
                %s449 = ssub.s32 16, 1
                loop: start=0, step=1, limit=1
                $region91: #{tpu_custom_call.1} parent=82 // loop_pre_header
                  _
                $region92: #{tpu_custom_call.1} parent=82 // loop_header
                  %s451 = sphi 0, %s455
                  %p452 = scmp.ge.s32.totalorder %s451, 1
                  %s456 = sphi %s357, %s357
                  %s457 = sphi %s351, %s351
                $region93: #{tpu_custom_call.1} parent=82 // loop_header_branch
                  %454 = sbr.rel (%p452) target = $region97
                $region94: #{tpu_custom_call.1} parent=82 // loop_body
                  %v458 = vld [vmem:[%s456] sm:%s449]
                  %459 = vst [vmem:[%s457] sm:%s449] %v458
                  %v460 = vld [vmem:[%s456 + $0x4] sm:%s449]
                  %461 = vst [vmem:[%s457 + $0x4] sm:%s449] %v460
                  %v462 = vld [vmem:[%s456 + $0x8] sm:%s449]
                  %463 = vst [vmem:[%s457 + $0x8] sm:%s449] %v462
                  %v464 = vld [vmem:[%s456 + $0xc] sm:%s449]
                  %465 = vst [vmem:[%s457 + $0xc] sm:%s449] %v464
                  %v466 = vld [vmem:[%s456 + $0x20] sm:%s449]
                  %467 = vst [vmem:[%s457 + $0x10] sm:%s449] %v466
                  %v468 = vld [vmem:[%s456 + $0x24] sm:%s449]
                  %469 = vst [vmem:[%s457 + $0x14] sm:%s449] %v468
                  %v470 = vld [vmem:[%s456 + $0x28] sm:%s449]
                  %471 = vst [vmem:[%s457 + $0x18] sm:%s449] %v470
                  %v472 = vld [vmem:[%s456 + $0x2c] sm:%s449]
                  %473 = vst [vmem:[%s457 + $0x1c] sm:%s449] %v472
                  %v474 = vld [vmem:[%s456 + $0x40] sm:%s449]
                  %475 = vst [vmem:[%s457 + $0x20] sm:%s449] %v474
                  %v476 = vld [vmem:[%s456 + $0x44] sm:%s449]
                  %477 = vst [vmem:[%s457 + $0x24] sm:%s449] %v476
                  %v478 = vld [vmem:[%s456 + $0x48] sm:%s449]
                  %479 = vst [vmem:[%s457 + $0x28] sm:%s449] %v478
                  %v480 = vld [vmem:[%s456 + $0x4c] sm:%s449]
                  %481 = vst [vmem:[%s457 + $0x2c] sm:%s449] %v480
                  %v482 = vld [vmem:[%s456 + $0x60] sm:%s449]
                  %483 = vst [vmem:[%s457 + $0x30] sm:%s449] %v482
                  %v484 = vld [vmem:[%s456 + $0x64] sm:%s449]
                  %485 = vst [vmem:[%s457 + $0x34] sm:%s449] %v484
                  %v486 = vld [vmem:[%s456 + $0x68] sm:%s449]
                  %487 = vst [vmem:[%s457 + $0x38] sm:%s449] %v486
                  %v488 = vld [vmem:[%s456 + $0x6c] sm:%s449]
                  %489 = vst [vmem:[%s457 + $0x3c] sm:%s449] %v488
                  %v490 = vld [vmem:[%s456 + $0x80] sm:%s449]
                  %491 = vst [vmem:[%s457 + $0x40] sm:%s449] %v490
                  %v492 = vld [vmem:[%s456 + $0x84] sm:%s449]
                  %493 = vst [vmem:[%s457 + $0x44] sm:%s449] %v492
                  %v494 = vld [vmem:[%s456 + $0x88] sm:%s449]
                  %495 = vst [vmem:[%s457 + $0x48] sm:%s449] %v494
                  %v496 = vld [vmem:[%s456 + $0x8c] sm:%s449]
                  %497 = vst [vmem:[%s457 + $0x4c] sm:%s449] %v496
                  %v498 = vld [vmem:[%s456 + $0xa0] sm:%s449]
                  %499 = vst [vmem:[%s457 + $0x50] sm:%s449] %v498
                  %v500 = vld [vmem:[%s456 + $0xa4] sm:%s449]
                  %501 = vst [vmem:[%s457 + $0x54] sm:%s449] %v500
                  %v502 = vld [vmem:[%s456 + $0xa8] sm:%s449]
                  %503 = vst [vmem:[%s457 + $0x58] sm:%s449] %v502
                  %v504 = vld [vmem:[%s456 + $0xac] sm:%s449]
                  %505 = vst [vmem:[%s457 + $0x5c] sm:%s449] %v504
                  %v506 = vld [vmem:[%s456 + $0xc0] sm:%s449]
                  %507 = vst [vmem:[%s457 + $0x60] sm:%s449] %v506
                  %v508 = vld [vmem:[%s456 + $0xc4] sm:%s449]
                  %509 = vst [vmem:[%s457 + $0x64] sm:%s449] %v508
                  %v510 = vld [vmem:[%s456 + $0xc8] sm:%s449]
                  %511 = vst [vmem:[%s457 + $0x68] sm:%s449] %v510
                  %v512 = vld [vmem:[%s456 + $0xcc] sm:%s449]
                  %513 = vst [vmem:[%s457 + $0x6c] sm:%s449] %v512
                  %v514 = vld [vmem:[%s456 + $0xe0] sm:%s449]
                  %515 = vst [vmem:[%s457 + $0x70] sm:%s449] %v514
                  %v516 = vld [vmem:[%s456 + $0xe4] sm:%s449]
                  %517 = vst [vmem:[%s457 + $0x74] sm:%s449] %v516
                  %v518 = vld [vmem:[%s456 + $0xe8] sm:%s449]
                  %519 = vst [vmem:[%s457 + $0x78] sm:%s449] %v518
                  %v520 = vld [vmem:[%s456 + $0xec] sm:%s449]
                  %521 = vst [vmem:[%s457 + $0x7c] sm:%s449] %v520
                $region95: #{tpu_custom_call.1} parent=82 // loop_footer
                  %s455 = sadd.s32 1, %s451
                $region96: #{tpu_custom_call.1} parent=82 // loop_footer_branch
                  %450 = sbr.rel target = $region92
                $region97: #{tpu_custom_call.1} parent=82 // loop_exit
                  _
              $region83: #{tpu_custom_call.1} parent=67 // pred_fallthru
                _
            $region68: #{tpu_custom_call.1} parent=63 // pred_fallthru
              _
            // Predicated region
            $region69: #{tpu_custom_call.1} parent=63 // pred_check
              _
            $region70: #{tpu_custom_call.1} parent=63 // pred_check_branch
              %363 = sbr.rel (0) target = $region72
            $region71: #{tpu_custom_call.1} parent=63 // pred_region
              %s365 = ssub.s32 16, 1
              loop: start=0, step=1, limit=1
              $region73: #{tpu_custom_call.1} parent=71 // loop_pre_header
                _
              $region74: #{tpu_custom_call.1} parent=71 // loop_header
                %s367 = sphi 0, %s371
                %p368 = scmp.ge.s32.totalorder %s367, 1
                %s372 = sphi %s357, %s357
                %s373 = sphi %s351, %s351
              $region75: #{tpu_custom_call.1} parent=71 // loop_header_branch
                %370 = sbr.rel (%p368) target = $region79
              $region76: #{tpu_custom_call.1} parent=71 // loop_body
                %v374 = vld [vmem:[%s372] sm:%s365]
                %375 = vst [vmem:[%s373] sm:%s365] %v374
                %v376 = vld [vmem:[%s372 + $0x4] sm:%s365]
                %377 = vst [vmem:[%s373 + $0x4] sm:%s365] %v376
                %v378 = vld [vmem:[%s372 + $0x8] sm:%s365]
                %379 = vst [vmem:[%s373 + $0x8] sm:%s365] %v378
                %v380 = vld [vmem:[%s372 + $0xc] sm:%s365]
                %381 = vst [vmem:[%s373 + $0xc] sm:%s365] %v380
                %v382 = vld [vmem:[%s372 + $0x20] sm:%s365]
                %383 = vst [vmem:[%s373 + $0x10] sm:%s365] %v382
                %v384 = vld [vmem:[%s372 + $0x24] sm:%s365]
                %385 = vst [vmem:[%s373 + $0x14] sm:%s365] %v384
                %v386 = vld [vmem:[%s372 + $0x28] sm:%s365]
                %387 = vst [vmem:[%s373 + $0x18] sm:%s365] %v386
                %v388 = vld [vmem:[%s372 + $0x2c] sm:%s365]
                %389 = vst [vmem:[%s373 + $0x1c] sm:%s365] %v388
                %v390 = vld [vmem:[%s372 + $0x40] sm:%s365]
                %391 = vst [vmem:[%s373 + $0x20] sm:%s365] %v390
                %v392 = vld [vmem:[%s372 + $0x44] sm:%s365]
                %393 = vst [vmem:[%s373 + $0x24] sm:%s365] %v392
                %v394 = vld [vmem:[%s372 + $0x48] sm:%s365]
                %395 = vst [vmem:[%s373 + $0x28] sm:%s365] %v394
                %v396 = vld [vmem:[%s372 + $0x4c] sm:%s365]
                %397 = vst [vmem:[%s373 + $0x2c] sm:%s365] %v396
                %v398 = vld [vmem:[%s372 + $0x60] sm:%s365]
                %399 = vst [vmem:[%s373 + $0x30] sm:%s365] %v398
                %v400 = vld [vmem:[%s372 + $0x64] sm:%s365]
                %401 = vst [vmem:[%s373 + $0x34] sm:%s365] %v400
                %v402 = vld [vmem:[%s372 + $0x68] sm:%s365]
                %403 = vst [vmem:[%s373 + $0x38] sm:%s365] %v402
                %v404 = vld [vmem:[%s372 + $0x6c] sm:%s365]
                %405 = vst [vmem:[%s373 + $0x3c] sm:%s365] %v404
                %v406 = vld [vmem:[%s372 + $0x80] sm:%s365]
                %407 = vst [vmem:[%s373 + $0x40] sm:%s365] %v406
                %v408 = vld [vmem:[%s372 + $0x84] sm:%s365]
                %409 = vst [vmem:[%s373 + $0x44] sm:%s365] %v408
                %v410 = vld [vmem:[%s372 + $0x88] sm:%s365]
                %411 = vst [vmem:[%s373 + $0x48] sm:%s365] %v410
                %v412 = vld [vmem:[%s372 + $0x8c] sm:%s365]
                %413 = vst [vmem:[%s373 + $0x4c] sm:%s365] %v412
                %v414 = vld [vmem:[%s372 + $0xa0] sm:%s365]
                %415 = vst [vmem:[%s373 + $0x50] sm:%s365] %v414
                %v416 = vld [vmem:[%s372 + $0xa4] sm:%s365]
                %417 = vst [vmem:[%s373 + $0x54] sm:%s365] %v416
                %v418 = vld [vmem:[%s372 + $0xa8] sm:%s365]
                %419 = vst [vmem:[%s373 + $0x58] sm:%s365] %v418
                %v420 = vld [vmem:[%s372 + $0xac] sm:%s365]
                %421 = vst [vmem:[%s373 + $0x5c] sm:%s365] %v420
                %v422 = vld [vmem:[%s372 + $0xc0] sm:%s365]
                %423 = vst [vmem:[%s373 + $0x60] sm:%s365] %v422
                %v424 = vld [vmem:[%s372 + $0xc4] sm:%s365]
                %425 = vst [vmem:[%s373 + $0x64] sm:%s365] %v424
                %v426 = vld [vmem:[%s372 + $0xc8] sm:%s365]
                %427 = vst [vmem:[%s373 + $0x68] sm:%s365] %v426
                %v428 = vld [vmem:[%s372 + $0xcc] sm:%s365]
                %429 = vst [vmem:[%s373 + $0x6c] sm:%s365] %v428
                %v430 = vld [vmem:[%s372 + $0xe0] sm:%s365]
                %431 = vst [vmem:[%s373 + $0x70] sm:%s365] %v430
                %v432 = vld [vmem:[%s372 + $0xe4] sm:%s365]
                %433 = vst [vmem:[%s373 + $0x74] sm:%s365] %v432
                %v434 = vld [vmem:[%s372 + $0xe8] sm:%s365]
                %435 = vst [vmem:[%s373 + $0x78] sm:%s365] %v434
                %v436 = vld [vmem:[%s372 + $0xec] sm:%s365]
                %437 = vst [vmem:[%s373 + $0x7c] sm:%s365] %v436
              $region77: #{tpu_custom_call.1} parent=71 // loop_footer
                %s371 = sadd.s32 1, %s367
              $region78: #{tpu_custom_call.1} parent=71 // loop_footer_branch
                %366 = sbr.rel target = $region74
              $region79: #{tpu_custom_call.1} parent=71 // loop_exit
                _
            $region72: #{tpu_custom_call.1} parent=63 // pred_fallthru
              _
          $region64: #{tpu_custom_call.1} parent=59 // pred_fallthru
            _
          %522 = vnop
        $region60: #{tpu_custom_call.1} parent=55 // pred_fallthru
          _
      $region56: #{tpu_custom_call.1} parent=5 // pred_fallthru
        _
      %p523 = scmp.le.s32.totalorder 1, %s20
      %p524 = scmp.lt.s32.totalorder %s20, 5
      %p525 = pnand %p523, %p524
      %p526 = pneg %p525
      // Predicated region
      $region98: #{tpu_custom_call.1} parent=5 // pred_check
        _
      $region99: #{tpu_custom_call.1} parent=5 // pred_check_branch
        %528 = sbr.rel (%p525) target = $region101
      $region100: #{tpu_custom_call.1} parent=5 // pred_region
        %s529 = ssub.s32 %s20, 1
        %s530 = sand.u32 %s47, 1
        %s531 = sand.u32 %s47, 1
        %s532 = smul.addr %s531, 128
        %s533 = scalar_lea.vmem [#allocation3], %s532
        // Predicated region
        $region102: #{tpu_custom_call.1} parent=100 // pred_check
          %p534 = pneg %p60
        $region103: #{tpu_custom_call.1} parent=100 // pred_check_branch
          %536 = sbr.rel (%p534) target = $region105
        $region104: #{tpu_custom_call.1} parent=100 // pred_region
          _
        $region105: #{tpu_custom_call.1} parent=100 // pred_fallthru
          _
        %s537 = sand.u32 %s47, 1
        %s538 = sand.u32 %s47, 1
        %s539 = smul.addr %s538, 128
        %s540 = scalar_lea.vmem [#allocation3], %s539
        %p541 = pneg %p60
        %p542 = pneg %p57
        %p543 = pneg %p81
        %p544 = pneg %p78
        %p545 = pneg %p102
        %p546 = pneg %p99
        %p547 = pneg %p123
        %p548 = pneg %p120
        %p549 = pneg %p144
        %p550 = pneg %p141
        %p551 = pneg %p165
        %p552 = pneg %p162
        %p553 = pneg %p186
        %p554 = pneg %p183
        %p555 = pneg %p207
        %p556 = pneg %p204
        %p557 = pneg %p228
        %p558 = pneg %p225
        %p559 = pneg %p249
        %p560 = pneg %p246
        %p561 = pneg %p270
        %p562 = pneg %p267
        %p563 = pneg %p296
        %p564 = pneg %p293
        %s565 = sand.u32 %s283, 1
        %s566 = scalar_lea.sflag [#allocation5], %s565
        %s567 = sand.u32 %s283, 1
        %s568 = smul.addr %s567, 8
        %s569 = scalar_lea.vmem [#allocation4], %s568
        %s570 = smul.u32 8, %s29
        %s571 = smul.u32 4, %s30
        %p573 = scmp.eq.s32.totalorder %s30, 0
        // Predicated region
        $region106: #{tpu_custom_call.1} parent=100 // pred_check
          %p574 = pneg %p573
        $region107: #{tpu_custom_call.1} parent=100 // pred_check_branch
          %576 = sbr.rel (%p574) target = $region109
        $region108: #{tpu_custom_call.1} parent=100 // pred_region
          %577 = vst [vmem:[#allocation2] sm:$0xff] -inf
          %578 = vst [vmem:[#allocation2 + $0x8] sm:$0xff] -inf
        $region109: #{tpu_custom_call.1} parent=100 // pred_fallthru
          _
        %v579 = vld [vmem:[%s533] sm:$0xf]
        %v580 = vld [vmem:[%s533 + $0x4] sm:$0xf]
        %v581 = vld [vmem:[%s533 + $0x8] sm:$0xf]
        %v582 = vld [vmem:[%s533 + $0xc] sm:$0xf]
        %v583 = vld [vmem:[%s533 + $0x10] sm:$0xf]
        %v584 = vld [vmem:[%s533 + $0x14] sm:$0xf]
        %v585 = vld [vmem:[%s533 + $0x18] sm:$0xf]
        %v586 = vld [vmem:[%s533 + $0x1c] sm:$0xf]
        %v587 = vld [vmem:[%s533 + $0x20] sm:$0xf]
        %v588 = vld [vmem:[%s533 + $0x24] sm:$0xf]
        %v589 = vld [vmem:[%s533 + $0x28] sm:$0xf]
        %v590 = vld [vmem:[%s533 + $0x2c] sm:$0xf]
        %v591 = vld [vmem:[%s533 + $0x30] sm:$0xf]
        %v592 = vld [vmem:[%s533 + $0x34] sm:$0xf]
        %v593 = vld [vmem:[%s533 + $0x38] sm:$0xf]
        %v594 = vld [vmem:[%s533 + $0x3c] sm:$0xf]
        %v595 = vld [vmem:[%s533 + $0x40] sm:$0xf]
        %v596 = vld [vmem:[%s533 + $0x44] sm:$0xf]
        %v597 = vld [vmem:[%s533 + $0x48] sm:$0xf]
        %v598 = vld [vmem:[%s533 + $0x4c] sm:$0xf]
        %v599 = vld [vmem:[%s533 + $0x50] sm:$0xf]
        %v600 = vld [vmem:[%s533 + $0x54] sm:$0xf]
        %v601 = vld [vmem:[%s533 + $0x58] sm:$0xf]
        %v602 = vld [vmem:[%s533 + $0x5c] sm:$0xf]
        %v603 = vld [vmem:[%s533 + $0x60] sm:$0xf]
        %v604 = vld [vmem:[%s533 + $0x64] sm:$0xf]
        %v605 = vld [vmem:[%s533 + $0x68] sm:$0xf]
        %v606 = vld [vmem:[%s533 + $0x6c] sm:$0xf]
        %v607 = vld [vmem:[%s533 + $0x70] sm:$0xf]
        %v608 = vld [vmem:[%s533 + $0x74] sm:$0xf]
        %v609 = vld [vmem:[%s533 + $0x78] sm:$0xf]
        %v610 = vld [vmem:[%s533 + $0x7c] sm:$0xf]
        %v611 = vld [vmem:[%s1] sm:$0xf]
        %v612 = vld [vmem:[%s2] sm:$0x1]
        %v614 = vlaneseq
        %v615 = vshrl.u32 %v614, 7
        %v616 = vsub.s32 0, %v615
        %v617 = vrot.slane %v612, %v616
        %v651 = vunpack.c.l.b16 %v579
        %v652 = vunpack.c.l.b16 %v580
        %v653 = vunpack.c.l.b16 %v581
        %v654 = vunpack.c.l.b16 %v582
        %v655 = vunpack.c.l.b16 %v583
        %v656 = vunpack.c.l.b16 %v584
        %v657 = vunpack.c.l.b16 %v585
        %v658 = vunpack.c.l.b16 %v586
        %v659 = vunpack.c.l.b16 %v587
        %v660 = vunpack.c.l.b16 %v588
        %v661 = vunpack.c.l.b16 %v589
        %v662 = vunpack.c.l.b16 %v590
        %v663 = vunpack.c.l.b16 %v591
        %v664 = vunpack.c.l.b16 %v592
        %v665 = vunpack.c.l.b16 %v593
        %v666 = vunpack.c.l.b16 %v594
        %v667 = vunpack.c.l.b16 %v595
        %v668 = vunpack.c.l.b16 %v596
        %v669 = vunpack.c.l.b16 %v597
        %v670 = vunpack.c.l.b16 %v598
        %v671 = vunpack.c.l.b16 %v599
        %v672 = vunpack.c.l.b16 %v600
        %v673 = vunpack.c.l.b16 %v601
        %v674 = vunpack.c.l.b16 %v602
        %v675 = vunpack.c.l.b16 %v603
        %v676 = vunpack.c.l.b16 %v604
        %v677 = vunpack.c.l.b16 %v605
        %v678 = vunpack.c.l.b16 %v606
        %v679 = vunpack.c.l.b16 %v607
        %v680 = vunpack.c.l.b16 %v608
        %v681 = vunpack.c.l.b16 %v609
        %v682 = vunpack.c.l.b16 %v610
        %v683 = vpack.c.b16 %v652, %v651
        %v684 = vpack.c.b16 %v654, %v653
        %v685 = vpack.c.b16 %v656, %v655
        %v686 = vpack.c.b16 %v658, %v657
        %v687 = vpack.c.b16 %v660, %v659
        %v688 = vpack.c.b16 %v662, %v661
        %v689 = vpack.c.b16 %v664, %v663
        %v690 = vpack.c.b16 %v666, %v665
        %v691 = vpack.c.b16 %v668, %v667
        %v692 = vpack.c.b16 %v670, %v669
        %v693 = vpack.c.b16 %v672, %v671
        %v694 = vpack.c.b16 %v674, %v673
        %v695 = vpack.c.b16 %v676, %v675
        %v696 = vpack.c.b16 %v678, %v677
        %v697 = vpack.c.b16 %v680, %v679
        %v698 = vpack.c.b16 %v682, %v681
        %vm699 = vcmask 64512
        %v701 = vsel %vm699, %v683, 0
        %v704 = vsel %vm699, %v684, 0
        %v707 = vsel %vm699, %v685, 0
        %v710 = vsel %vm699, %v686, 0
        %v713 = vsel %vm699, %v687, 0
        %v716 = vsel %vm699, %v688, 0
        %v719 = vsel %vm699, %v689, 0
        %v722 = vsel %vm699, %v690, 0
        %v725 = vsel %vm699, %v691, 0
        %v728 = vsel %vm699, %v692, 0
        %v731 = vsel %vm699, %v693, 0
        %v734 = vsel %vm699, %v694, 0
        %v737 = vsel %vm699, %v695, 0
        %v740 = vsel %vm699, %v696, 0
        %v743 = vsel %vm699, %v697, 0
        %v746 = vsel %vm699, %v698, 0
        %vm748 = vcmask 1043456
        %v750 = vsel %vm748, %v611, 0
        %752 = vmatprep.subr.bf16.mxu0 0
        %753 = vmatpush1.bf16.msra.mxu0 0
        %754 = vmatprep.subr.bf16.mxu0 0
        %755 = vmatpush1.bf16.msra.mxu0 0
        %756 = vmatprep.subr.bf16.mxu0 0
        %757 = vmatpush1.bf16.msra.mxu0 0
        %758 = vmatprep.subr.bf16.mxu0 0
        %759 = vmatpush1.bf16.msra.mxu0 0
        %760 = vmatprep.subr.bf16.mxu0 0
        %761 = vmatpush1.bf16.msra.mxu0 0
        %762 = vmatprep.subr.bf16.mxu0 0
        %763 = vmatpush1.bf16.msra.mxu0 0
        %764 = vmatprep.subr.bf16.mxu0 0
        %765 = vmatpush1.bf16.msra.mxu0 0
        %766 = vmatprep.subr.bf16.mxu0 0
        %767 = vmatpush1.bf16.msra.mxu0 %v750
        %768 = vmatprep.subr.bf16.mxu0 0
        %769 = vmatpush2.bf16.msra.mxu0 0
        %770 = vmatprep.subr.bf16.mxu0 0
        %771 = vmatpush2.bf16.msra.mxu0 0
        %772 = vmatprep.subr.bf16.mxu0 0
        %773 = vmatpush2.bf16.msra.mxu0 0
        %774 = vmatprep.subr.bf16.mxu0 0
        %775 = vmatpush2.bf16.msra.mxu0 0
        %776 = vmatprep.subr.bf16.mxu0 0
        %777 = vmatpush2.bf16.msra.mxu0 0
        %778 = vmatprep.subr.bf16.mxu0 0
        %779 = vmatpush2.bf16.msra.mxu0 0
        %780 = vmatprep.subr.bf16.mxu0 0
        %781 = vmatpush2.bf16.msra.mxu0 0
        %782 = vmatprep.subr.bf16.mxu0 0
        %783 = vmatpush2.bf16.msra.mxu0 0
        %784 = vmatprep.mubr.bf16.mxu0 0
        %785 = vmatmul.mubr.bf16.gmra.mxu0 %v701
        %v786 = vpop.f32.mrf.mxu0
        %v787 = vadd.f32 %v617, %v786
        %v788 = vpop.f32.mrf.mxu0
        %v789 = vpop.f32.mrf.mxu0
        %v790 = vadd.f32 %v617, %v789
        %v791 = vpop.f32.mrf.mxu0
        %792 = vmatprep.mubr.bf16.mxu0 0
        %793 = vmatmul.mubr.bf16.gmra.mxu0 %v704
        %v794 = vpop.f32.mrf.mxu0
        %v795 = vadd.f32 %v617, %v794
        %v796 = vpop.f32.mrf.mxu0
        %v797 = vpop.f32.mrf.mxu0
        %v798 = vadd.f32 %v617, %v797
        %v799 = vpop.f32.mrf.mxu0
        %800 = vmatprep.mubr.bf16.mxu0 0
        %801 = vmatmul.mubr.bf16.gmra.mxu0 %v707
        %v802 = vpop.f32.mrf.mxu0
        %v803 = vadd.f32 %v617, %v802
        %v804 = vpop.f32.mrf.mxu0
        %v805 = vpop.f32.mrf.mxu0
        %v806 = vadd.f32 %v617, %v805
        %v807 = vpop.f32.mrf.mxu0
        %808 = vmatprep.mubr.bf16.mxu0 0
        %809 = vmatmul.mubr.bf16.gmra.mxu0 %v710
        %v810 = vpop.f32.mrf.mxu0
        %v811 = vadd.f32 %v617, %v810
        %v812 = vpop.f32.mrf.mxu0
        %v813 = vpop.f32.mrf.mxu0
        %v814 = vadd.f32 %v617, %v813
        %v815 = vpop.f32.mrf.mxu0
        %816 = vmatprep.mubr.bf16.mxu0 0
        %817 = vmatmul.mubr.bf16.gmra.mxu0 %v713
        %v818 = vpop.f32.mrf.mxu0
        %v819 = vadd.f32 %v617, %v818
        %v820 = vpop.f32.mrf.mxu0
        %v821 = vpop.f32.mrf.mxu0
        %v822 = vadd.f32 %v617, %v821
        %v823 = vpop.f32.mrf.mxu0
        %824 = vmatprep.mubr.bf16.mxu0 0
        %825 = vmatmul.mubr.bf16.gmra.mxu0 %v716
        %v826 = vpop.f32.mrf.mxu0
        %v827 = vadd.f32 %v617, %v826
        %v828 = vpop.f32.mrf.mxu0
        %v829 = vpop.f32.mrf.mxu0
        %v830 = vadd.f32 %v617, %v829
        %v831 = vpop.f32.mrf.mxu0
        %832 = vmatprep.mubr.bf16.mxu0 0
        %833 = vmatmul.mubr.bf16.gmra.mxu0 %v719
        %v834 = vpop.f32.mrf.mxu0
        %v835 = vadd.f32 %v617, %v834
        %v836 = vpop.f32.mrf.mxu0
        %v837 = vpop.f32.mrf.mxu0
        %v838 = vadd.f32 %v617, %v837
        %v839 = vpop.f32.mrf.mxu0
        %840 = vmatprep.mubr.bf16.mxu0 0
        %841 = vmatmul.mubr.bf16.gmra.mxu0 %v722
        %v842 = vpop.f32.mrf.mxu0
        %v843 = vadd.f32 %v617, %v842
        %v844 = vpop.f32.mrf.mxu0
        %v845 = vpop.f32.mrf.mxu0
        %v846 = vadd.f32 %v617, %v845
        %v847 = vpop.f32.mrf.mxu0
        %848 = vmatprep.mubr.bf16.mxu0 0
        %849 = vmatmul.mubr.bf16.gmra.mxu0 %v725
        %v850 = vpop.f32.mrf.mxu0
        %v851 = vadd.f32 %v617, %v850
        %v852 = vpop.f32.mrf.mxu0
        %v853 = vpop.f32.mrf.mxu0
        %v854 = vadd.f32 %v617, %v853
        %v855 = vpop.f32.mrf.mxu0
        %856 = vmatprep.mubr.bf16.mxu0 0
        %857 = vmatmul.mubr.bf16.gmra.mxu0 %v728
        %v858 = vpop.f32.mrf.mxu0
        %v859 = vadd.f32 %v617, %v858
        %v860 = vpop.f32.mrf.mxu0
        %v861 = vpop.f32.mrf.mxu0
        %v862 = vadd.f32 %v617, %v861
        %v863 = vpop.f32.mrf.mxu0
        %864 = vmatprep.mubr.bf16.mxu0 0
        %865 = vmatmul.mubr.bf16.gmra.mxu0 %v731
        %v866 = vpop.f32.mrf.mxu0
        %v867 = vadd.f32 %v617, %v866
        %v868 = vpop.f32.mrf.mxu0
        %v869 = vpop.f32.mrf.mxu0
        %v870 = vadd.f32 %v617, %v869
        %v871 = vpop.f32.mrf.mxu0
        %872 = vmatprep.mubr.bf16.mxu0 0
        %873 = vmatmul.mubr.bf16.gmra.mxu0 %v734
        %v874 = vpop.f32.mrf.mxu0
        %v875 = vadd.f32 %v617, %v874
        %v876 = vpop.f32.mrf.mxu0
        %v877 = vpop.f32.mrf.mxu0
        %v878 = vadd.f32 %v617, %v877
        %v879 = vpop.f32.mrf.mxu0
        %880 = vmatprep.mubr.bf16.mxu0 0
        %881 = vmatmul.mubr.bf16.gmra.mxu0 %v737
        %v882 = vpop.f32.mrf.mxu0
        %v883 = vadd.f32 %v617, %v882
        %v884 = vpop.f32.mrf.mxu0
        %v885 = vpop.f32.mrf.mxu0
        %v886 = vadd.f32 %v617, %v885
        %v887 = vpop.f32.mrf.mxu0
        %888 = vmatprep.mubr.bf16.mxu0 0
        %889 = vmatmul.mubr.bf16.gmra.mxu0 %v740
        %v890 = vpop.f32.mrf.mxu0
        %v891 = vadd.f32 %v617, %v890
        %v892 = vpop.f32.mrf.mxu0
        %v893 = vpop.f32.mrf.mxu0
        %v894 = vadd.f32 %v617, %v893
        %v895 = vpop.f32.mrf.mxu0
        %896 = vmatprep.mubr.bf16.mxu0 0
        %897 = vmatmul.mubr.bf16.gmra.mxu0 %v743
        %v898 = vpop.f32.mrf.mxu0
        %v899 = vadd.f32 %v617, %v898
        %v900 = vpop.f32.mrf.mxu0
        %v901 = vpop.f32.mrf.mxu0
        %v902 = vadd.f32 %v617, %v901
        %v903 = vpop.f32.mrf.mxu0
        %904 = vmatprep.mubr.bf16.mxu0 0
        %905 = vmatmul.mubr.bf16.gmra.mxu0 %v746
        %v906 = vpop.f32.mrf.mxu0
        %v907 = vadd.f32 %v617, %v906
        %v908 = vpop.f32.mrf.mxu0
        %v909 = vpop.f32.mrf.mxu0
        %v910 = vadd.f32 %v617, %v909
        %v911 = vpop.f32.mrf.mxu0
        %912 = vdwg.mxu0
        %v913 = vmax.f32 %v787, 0.0
        %v914 = vmax.f32 %v790, 0.0
        %v915 = vmax.f32 %v795, 0.0
        %v916 = vmax.f32 %v798, 0.0
        %v917 = vmax.f32 %v803, 0.0
        %v918 = vmax.f32 %v806, 0.0
        %v919 = vmax.f32 %v811, 0.0
        %v920 = vmax.f32 %v814, 0.0
        %v921 = vmax.f32 %v819, 0.0
        %v922 = vmax.f32 %v822, 0.0
        %v923 = vmax.f32 %v827, 0.0
        %v924 = vmax.f32 %v830, 0.0
        %v925 = vmax.f32 %v835, 0.0
        %v926 = vmax.f32 %v838, 0.0
        %v927 = vmax.f32 %v843, 0.0
        %v928 = vmax.f32 %v846, 0.0
        %v929 = vmax.f32 %v851, 0.0
        %v930 = vmax.f32 %v854, 0.0
        %v931 = vmax.f32 %v859, 0.0
        %v932 = vmax.f32 %v862, 0.0
        %v933 = vmax.f32 %v867, 0.0
        %v934 = vmax.f32 %v870, 0.0
        %v935 = vmax.f32 %v875, 0.0
        %v936 = vmax.f32 %v878, 0.0
        %v937 = vmax.f32 %v883, 0.0
        %v938 = vmax.f32 %v886, 0.0
        %v939 = vmax.f32 %v891, 0.0
        %v940 = vmax.f32 %v894, 0.0
        %v941 = vmax.f32 %v899, 0.0
        %v942 = vmax.f32 %v902, 0.0
        %v943 = vmax.f32 %v907, 0.0
        %v944 = vmax.f32 %v910, 0.0
        %v945 = vpack.c.bf16 %v914, %v913
        %v946 = vpack.c.bf16 %v916, %v915
        %v947 = vpack.c.bf16 %v918, %v917
        %v948 = vpack.c.bf16 %v920, %v919
        %v949 = vpack.c.bf16 %v922, %v921
        %v950 = vpack.c.bf16 %v924, %v923
        %v951 = vpack.c.bf16 %v926, %v925
        %v952 = vpack.c.bf16 %v928, %v927
        %v953 = vpack.c.bf16 %v930, %v929
        %v954 = vpack.c.bf16 %v932, %v931
        %v955 = vpack.c.bf16 %v934, %v933
        %v956 = vpack.c.bf16 %v936, %v935
        %v957 = vpack.c.bf16 %v938, %v937
        %v958 = vpack.c.bf16 %v940, %v939
        %v959 = vpack.c.bf16 %v942, %v941
        %v960 = vpack.c.bf16 %v944, %v943
        %v961 = vld [vmem:[%s3] sm:$0xf]
        %v962 = vld [vmem:[%s3 + $0x4] sm:$0xf]
        %v963 = vld [vmem:[%s3 + $0x8] sm:$0xf]
        %v964 = vld [vmem:[%s3 + $0xc] sm:$0xf]
        %v965 = vld [vmem:[%s3 + $0x10] sm:$0xf]
        %v966 = vld [vmem:[%s3 + $0x14] sm:$0xf]
        %v967 = vld [vmem:[%s3 + $0x18] sm:$0xf]
        %v968 = vld [vmem:[%s3 + $0x1c] sm:$0xf]
        %v969 = vld [vmem:[%s4] sm:$0x1]
        %v971 = vlaneseq
        %v972 = vshrl.u32 %v971, 7
        %v973 = vsub.s32 0, %v972
        %v974 = vrot.slane %v969, %v973
        %v984 = vunpack.c.l.b16 %v961
        %v985 = vunpack.c.l.b16 %v962
        %v986 = vunpack.c.l.b16 %v963
        %v987 = vunpack.c.l.b16 %v964
        %v988 = vunpack.c.l.b16 %v965
        %v989 = vunpack.c.l.b16 %v966
        %v990 = vunpack.c.l.b16 %v967
        %v991 = vunpack.c.l.b16 %v968
        %v992 = vpack.c.b16 %v985, %v984
        %v993 = vpack.c.b16 %v987, %v986
        %v994 = vpack.c.b16 %v989, %v988
        %v995 = vpack.c.b16 %v991, %v990
        %vm1000 = vcmask 523264
        %v1002 = vsel %vm1000, %v945, 0
        %v1005 = vsel %vm1000, %v946, 0
        %v1008 = vsel %vm1000, %v947, 0
        %v1011 = vsel %vm1000, %v948, 0
        %v1014 = vsel %vm1000, %v949, 0
        %v1017 = vsel %vm1000, %v950, 0
        %v1020 = vsel %vm1000, %v951, 0
        %v1023 = vsel %vm1000, %v952, 0
        %v1026 = vsel %vm1000, %v953, 0
        %v1029 = vsel %vm1000, %v954, 0
        %v1032 = vsel %vm1000, %v955, 0
        %v1035 = vsel %vm1000, %v956, 0
        %v1038 = vsel %vm1000, %v957, 0
        %v1041 = vsel %vm1000, %v958, 0
        %v1044 = vsel %vm1000, %v959, 0
        %v1047 = vsel %vm1000, %v960, 0
        %1049 = vmatprep.subr.bf16.mxu0 0
        %1050 = vmatpush1.bf16.msra.mxu0 0
        %1051 = vmatprep.subr.bf16.mxu0 0
        %1052 = vmatpush1.bf16.msra.mxu0 0
        %1053 = vmatprep.subr.bf16.mxu0 0
        %1054 = vmatpush1.bf16.msra.mxu0 0
        %1055 = vmatprep.subr.bf16.mxu0 0
        %1056 = vmatpush1.bf16.msra.mxu0 0
        %1057 = vmatprep.subr.bf16.mxu0 0
        %1058 = vmatpush1.bf16.msra.mxu0 %v995
        %1059 = vmatprep.subr.bf16.mxu0 0
        %1060 = vmatpush1.bf16.msra.mxu0 %v994
        %1061 = vmatprep.subr.bf16.mxu0 0
        %1062 = vmatpush1.bf16.msra.mxu0 %v993
        %1063 = vmatprep.subr.bf16.mxu0 0
        %1064 = vmatpush1.bf16.msra.mxu0 %v992
        %1065 = vmatprep.subr.bf16.mxu0 0
        %1066 = vmatpush2.bf16.msra.mxu0 0
        %1067 = vmatprep.subr.bf16.mxu0 0
        %1068 = vmatpush2.bf16.msra.mxu0 0
        %1069 = vmatprep.subr.bf16.mxu0 0
        %1070 = vmatpush2.bf16.msra.mxu0 0
        %1071 = vmatprep.subr.bf16.mxu0 0
        %1072 = vmatpush2.bf16.msra.mxu0 0
        %1073 = vmatprep.subr.bf16.mxu0 0
        %1074 = vmatpush2.bf16.msra.mxu0 0
        %1075 = vmatprep.subr.bf16.mxu0 0
        %1076 = vmatpush2.bf16.msra.mxu0 0
        %1077 = vmatprep.subr.bf16.mxu0 0
        %1078 = vmatpush2.bf16.msra.mxu0 0
        %1079 = vmatprep.subr.bf16.mxu0 0
        %1080 = vmatpush2.bf16.msra.mxu0 0
        %1081 = vmatprep.mubr.bf16.mxu0 0
        %1082 = vmatmul.mubr.bf16.gmra.mxu0 %v1002
        %v1083 = vpop.f32.mrf.mxu0
        %v1084 = vadd.f32 %v974, %v1083
        %v1085 = vpop.f32.mrf.mxu0
        %v1086 = vpop.f32.mrf.mxu0
        %v1087 = vadd.f32 %v974, %v1086
        %v1088 = vpop.f32.mrf.mxu0
        %1089 = vmatprep.mubr.bf16.mxu0 0
        %1090 = vmatmul.mubr.bf16.gmra.mxu0 %v1005
        %v1091 = vpop.f32.mrf.mxu0
        %v1092 = vadd.f32 %v974, %v1091
        %v1093 = vpop.f32.mrf.mxu0
        %v1094 = vpop.f32.mrf.mxu0
        %v1095 = vadd.f32 %v974, %v1094
        %v1096 = vpop.f32.mrf.mxu0
        %1097 = vmatprep.mubr.bf16.mxu0 0
        %1098 = vmatmul.mubr.bf16.gmra.mxu0 %v1008
        %v1099 = vpop.f32.mrf.mxu0
        %v1100 = vadd.f32 %v974, %v1099
        %v1101 = vpop.f32.mrf.mxu0
        %v1102 = vpop.f32.mrf.mxu0
        %v1103 = vadd.f32 %v974, %v1102
        %v1104 = vpop.f32.mrf.mxu0
        %1105 = vmatprep.mubr.bf16.mxu0 0
        %1106 = vmatmul.mubr.bf16.gmra.mxu0 %v1011
        %v1107 = vpop.f32.mrf.mxu0
        %v1108 = vadd.f32 %v974, %v1107
        %v1109 = vpop.f32.mrf.mxu0
        %v1110 = vpop.f32.mrf.mxu0
        %v1111 = vadd.f32 %v974, %v1110
        %v1112 = vpop.f32.mrf.mxu0
        %1113 = vmatprep.mubr.bf16.mxu0 0
        %1114 = vmatmul.mubr.bf16.gmra.mxu0 %v1014
        %v1115 = vpop.f32.mrf.mxu0
        %v1116 = vadd.f32 %v974, %v1115
        %v1117 = vpop.f32.mrf.mxu0
        %v1118 = vpop.f32.mrf.mxu0
        %v1119 = vadd.f32 %v974, %v1118
        %v1120 = vpop.f32.mrf.mxu0
        %1121 = vmatprep.mubr.bf16.mxu0 0
        %1122 = vmatmul.mubr.bf16.gmra.mxu0 %v1017
        %v1123 = vpop.f32.mrf.mxu0
        %v1124 = vadd.f32 %v974, %v1123
        %v1125 = vpop.f32.mrf.mxu0
        %v1126 = vpop.f32.mrf.mxu0
        %v1127 = vadd.f32 %v974, %v1126
        %v1128 = vpop.f32.mrf.mxu0
        %1129 = vmatprep.mubr.bf16.mxu0 0
        %1130 = vmatmul.mubr.bf16.gmra.mxu0 %v1020
        %v1131 = vpop.f32.mrf.mxu0
        %v1132 = vadd.f32 %v974, %v1131
        %v1133 = vpop.f32.mrf.mxu0
        %v1134 = vpop.f32.mrf.mxu0
        %v1135 = vadd.f32 %v974, %v1134
        %v1136 = vpop.f32.mrf.mxu0
        %1137 = vmatprep.mubr.bf16.mxu0 0
        %1138 = vmatmul.mubr.bf16.gmra.mxu0 %v1023
        %v1139 = vpop.f32.mrf.mxu0
        %v1140 = vadd.f32 %v974, %v1139
        %v1141 = vpop.f32.mrf.mxu0
        %v1142 = vpop.f32.mrf.mxu0
        %v1143 = vadd.f32 %v974, %v1142
        %v1144 = vpop.f32.mrf.mxu0
        %1145 = vmatprep.mubr.bf16.mxu0 0
        %1146 = vmatmul.mubr.bf16.gmra.mxu0 %v1026
        %v1147 = vpop.f32.mrf.mxu0
        %v1148 = vadd.f32 %v974, %v1147
        %v1149 = vpop.f32.mrf.mxu0
        %v1150 = vpop.f32.mrf.mxu0
        %v1151 = vadd.f32 %v974, %v1150
        %v1152 = vpop.f32.mrf.mxu0
        %1153 = vmatprep.mubr.bf16.mxu0 0
        %1154 = vmatmul.mubr.bf16.gmra.mxu0 %v1029
        %v1155 = vpop.f32.mrf.mxu0
        %v1156 = vadd.f32 %v974, %v1155
        %v1157 = vpop.f32.mrf.mxu0
        %v1158 = vpop.f32.mrf.mxu0
        %v1159 = vadd.f32 %v974, %v1158
        %v1160 = vpop.f32.mrf.mxu0
        %1161 = vmatprep.mubr.bf16.mxu0 0
        %1162 = vmatmul.mubr.bf16.gmra.mxu0 %v1032
        %v1163 = vpop.f32.mrf.mxu0
        %v1164 = vadd.f32 %v974, %v1163
        %v1165 = vpop.f32.mrf.mxu0
        %v1166 = vpop.f32.mrf.mxu0
        %v1167 = vadd.f32 %v974, %v1166
        %v1168 = vpop.f32.mrf.mxu0
        %1169 = vmatprep.mubr.bf16.mxu0 0
        %1170 = vmatmul.mubr.bf16.gmra.mxu0 %v1035
        %v1171 = vpop.f32.mrf.mxu0
        %v1172 = vadd.f32 %v974, %v1171
        %v1173 = vpop.f32.mrf.mxu0
        %v1174 = vpop.f32.mrf.mxu0
        %v1175 = vadd.f32 %v974, %v1174
        %v1176 = vpop.f32.mrf.mxu0
        %1177 = vmatprep.mubr.bf16.mxu0 0
        %1178 = vmatmul.mubr.bf16.gmra.mxu0 %v1038
        %v1179 = vpop.f32.mrf.mxu0
        %v1180 = vadd.f32 %v974, %v1179
        %v1181 = vpop.f32.mrf.mxu0
        %v1182 = vpop.f32.mrf.mxu0
        %v1183 = vadd.f32 %v974, %v1182
        %v1184 = vpop.f32.mrf.mxu0
        %1185 = vmatprep.mubr.bf16.mxu0 0
        %1186 = vmatmul.mubr.bf16.gmra.mxu0 %v1041
        %v1187 = vpop.f32.mrf.mxu0
        %v1188 = vadd.f32 %v974, %v1187
        %v1189 = vpop.f32.mrf.mxu0
        %v1190 = vpop.f32.mrf.mxu0
        %v1191 = vadd.f32 %v974, %v1190
        %v1192 = vpop.f32.mrf.mxu0
        %1193 = vmatprep.mubr.bf16.mxu0 0
        %1194 = vmatmul.mubr.bf16.gmra.mxu0 %v1044
        %v1195 = vpop.f32.mrf.mxu0
        %v1196 = vadd.f32 %v974, %v1195
        %v1197 = vpop.f32.mrf.mxu0
        %v1198 = vpop.f32.mrf.mxu0
        %v1199 = vadd.f32 %v974, %v1198
        %v1200 = vpop.f32.mrf.mxu0
        %1201 = vmatprep.mubr.bf16.mxu0 0
        %1202 = vmatmul.mubr.bf16.gmra.mxu0 %v1047
        %v1203 = vpop.f32.mrf.mxu0
        %v1204 = vadd.f32 %v974, %v1203
        %v1205 = vpop.f32.mrf.mxu0
        %v1206 = vpop.f32.mrf.mxu0
        %v1207 = vadd.f32 %v974, %v1206
        %v1208 = vpop.f32.mrf.mxu0
        %1209 = vdwg.mxu0
        %v1210 = vmax.f32 %v1084, 0.0
        %v1211 = vmax.f32 %v1087, 0.0
        %v1212 = vmax.f32 %v1092, 0.0
        %v1213 = vmax.f32 %v1095, 0.0
        %v1214 = vmax.f32 %v1100, 0.0
        %v1215 = vmax.f32 %v1103, 0.0
        %v1216 = vmax.f32 %v1108, 0.0
        %v1217 = vmax.f32 %v1111, 0.0
        %v1218 = vmax.f32 %v1116, 0.0
        %v1219 = vmax.f32 %v1119, 0.0
        %v1220 = vmax.f32 %v1124, 0.0
        %v1221 = vmax.f32 %v1127, 0.0
        %v1222 = vmax.f32 %v1132, 0.0
        %v1223 = vmax.f32 %v1135, 0.0
        %v1224 = vmax.f32 %v1140, 0.0
        %v1225 = vmax.f32 %v1143, 0.0
        %v1226 = vmax.f32 %v1148, 0.0
        %v1227 = vmax.f32 %v1151, 0.0
        %v1228 = vmax.f32 %v1156, 0.0
        %v1229 = vmax.f32 %v1159, 0.0
        %v1230 = vmax.f32 %v1164, 0.0
        %v1231 = vmax.f32 %v1167, 0.0
        %v1232 = vmax.f32 %v1172, 0.0
        %v1233 = vmax.f32 %v1175, 0.0
        %v1234 = vmax.f32 %v1180, 0.0
        %v1235 = vmax.f32 %v1183, 0.0
        %v1236 = vmax.f32 %v1188, 0.0
        %v1237 = vmax.f32 %v1191, 0.0
        %v1238 = vmax.f32 %v1196, 0.0
        %v1239 = vmax.f32 %v1199, 0.0
        %v1240 = vmax.f32 %v1204, 0.0
        %v1241 = vmax.f32 %v1207, 0.0
        %v1242 = vpack.c.bf16 %v1211, %v1210
        %v1243 = vpack.c.bf16 %v1213, %v1212
        %v1244 = vpack.c.bf16 %v1215, %v1214
        %v1245 = vpack.c.bf16 %v1217, %v1216
        %v1246 = vpack.c.bf16 %v1219, %v1218
        %v1247 = vpack.c.bf16 %v1221, %v1220
        %v1248 = vpack.c.bf16 %v1223, %v1222
        %v1249 = vpack.c.bf16 %v1225, %v1224
        %v1250 = vpack.c.bf16 %v1227, %v1226
        %v1251 = vpack.c.bf16 %v1229, %v1228
        %v1252 = vpack.c.bf16 %v1231, %v1230
        %v1253 = vpack.c.bf16 %v1233, %v1232
        %v1254 = vpack.c.bf16 %v1235, %v1234
        %v1255 = vpack.c.bf16 %v1237, %v1236
        %v1256 = vpack.c.bf16 %v1239, %v1238
        %v1257 = vpack.c.bf16 %v1241, %v1240
        %v1258 = vld [vmem:[%s5] sm:$0xff]
        %v1259 = vld [vmem:[%s5 + $0x8] sm:$0xff]
        %v1260 = vld [vmem:[%s5 + $0x10] sm:$0xff]
        %v1261 = vld [vmem:[%s5 + $0x18] sm:$0xff]
        %v1262 = vld [vmem:[%s5 + $0x20] sm:$0xff]
        %v1263 = vld [vmem:[%s5 + $0x28] sm:$0xff]
        %v1264 = vld [vmem:[%s5 + $0x30] sm:$0xff]
        %v1265 = vld [vmem:[%s5 + $0x38] sm:$0xff]
        %v1266 = vld [vmem:[%s5 + $0x40] sm:$0xff]
        %v1267 = vld [vmem:[%s5 + $0x48] sm:$0xff]
        %v1268 = vld [vmem:[%s5 + $0x50] sm:$0xff]
        %v1269 = vld [vmem:[%s5 + $0x58] sm:$0xff]
        %v1270 = vld [vmem:[%s5 + $0x60] sm:$0xff]
        %v1271 = vld [vmem:[%s5 + $0x68] sm:$0xff]
        %v1272 = vld [vmem:[%s5 + $0x70] sm:$0xff]
        %v1273 = vld [vmem:[%s5 + $0x78] sm:$0xff]
        %v1274 = vld [vmem:[%s6] sm:$0x3]
        %v1276 = vlaneseq
        %v1277 = vshrl.u32 %v1276, 7
        %v1278 = vsub.s32 0, %v1277
        %v1279 = vrot.slane %v1274, %v1278
        %v1280 = vlaneseq
        %v1281 = vshrl.u32 %v1280, 7
        %v1282 = vsub.s32 1, %v1281
        %v1283 = vrot.slane %v1274, %v1282
        %v1302 = vunpack.c.l.b16 %v1258
        %v1303 = vunpack.c.h.b16 %v1258
        %v1304 = vunpack.c.l.b16 %v1259
        %v1305 = vunpack.c.h.b16 %v1259
        %v1306 = vunpack.c.l.b16 %v1260
        %v1307 = vunpack.c.h.b16 %v1260
        %v1308 = vunpack.c.l.b16 %v1261
        %v1309 = vunpack.c.h.b16 %v1261
        %v1310 = vunpack.c.l.b16 %v1262
        %v1311 = vunpack.c.h.b16 %v1262
        %v1312 = vunpack.c.l.b16 %v1263
        %v1313 = vunpack.c.h.b16 %v1263
        %v1314 = vunpack.c.l.b16 %v1264
        %v1315 = vunpack.c.h.b16 %v1264
        %v1316 = vunpack.c.l.b16 %v1265
        %v1317 = vunpack.c.h.b16 %v1265
        %v1318 = vunpack.c.l.b16 %v1266
        %v1319 = vunpack.c.h.b16 %v1266
        %v1320 = vunpack.c.l.b16 %v1267
        %v1321 = vunpack.c.h.b16 %v1267
        %v1322 = vunpack.c.l.b16 %v1268
        %v1323 = vunpack.c.h.b16 %v1268
        %v1324 = vunpack.c.l.b16 %v1269
        %v1325 = vunpack.c.h.b16 %v1269
        %v1326 = vunpack.c.l.b16 %v1270
        %v1327 = vunpack.c.h.b16 %v1270
        %v1328 = vunpack.c.l.b16 %v1271
        %v1329 = vunpack.c.h.b16 %v1271
        %v1330 = vunpack.c.l.b16 %v1272
        %v1331 = vunpack.c.h.b16 %v1272
        %v1332 = vunpack.c.l.b16 %v1273
        %v1333 = vunpack.c.h.b16 %v1273
        %v1334 = vpack.c.b16 %v1304, %v1302
        %v1335 = vpack.c.b16 %v1305, %v1303
        %v1336 = vpack.c.b16 %v1308, %v1306
        %v1337 = vpack.c.b16 %v1309, %v1307
        %v1338 = vpack.c.b16 %v1312, %v1310
        %v1339 = vpack.c.b16 %v1313, %v1311
        %v1340 = vpack.c.b16 %v1316, %v1314
        %v1341 = vpack.c.b16 %v1317, %v1315
        %v1342 = vpack.c.b16 %v1320, %v1318
        %v1343 = vpack.c.b16 %v1321, %v1319
        %v1344 = vpack.c.b16 %v1324, %v1322
        %v1345 = vpack.c.b16 %v1325, %v1323
        %v1346 = vpack.c.b16 %v1328, %v1326
        %v1347 = vpack.c.b16 %v1329, %v1327
        %v1348 = vpack.c.b16 %v1332, %v1330
        %v1349 = vpack.c.b16 %v1333, %v1331
        %1366 = vmatprep.subr.bf16.mxu0 %v1349
        %1367 = vmatpush1.bf16.msra.mxu0 %v1348
        %1368 = vmatprep.subr.bf16.mxu0 %v1347
        %1369 = vmatpush1.bf16.msra.mxu0 %v1346
        %1370 = vmatprep.subr.bf16.mxu0 %v1345
        %1371 = vmatpush1.bf16.msra.mxu0 %v1344
        %1372 = vmatprep.subr.bf16.mxu0 %v1343
        %1373 = vmatpush1.bf16.msra.mxu0 %v1342
        %1374 = vmatprep.subr.bf16.mxu0 %v1341
        %1375 = vmatpush1.bf16.msra.mxu0 %v1340
        %1376 = vmatprep.subr.bf16.mxu0 %v1339
        %1377 = vmatpush1.bf16.msra.mxu0 %v1338
        %1378 = vmatprep.subr.bf16.mxu0 %v1337
        %1379 = vmatpush1.bf16.msra.mxu0 %v1336
        %1380 = vmatprep.subr.bf16.mxu0 %v1335
        %1381 = vmatpush1.bf16.msra.mxu0 %v1334
        %1382 = vmatprep.subr.bf16.mxu0 0
        %1383 = vmatpush2.bf16.msra.mxu0 0
        %1384 = vmatprep.subr.bf16.mxu0 0
        %1385 = vmatpush2.bf16.msra.mxu0 0
        %1386 = vmatprep.subr.bf16.mxu0 0
        %1387 = vmatpush2.bf16.msra.mxu0 0
        %1388 = vmatprep.subr.bf16.mxu0 0
        %1389 = vmatpush2.bf16.msra.mxu0 0
        %1390 = vmatprep.subr.bf16.mxu0 0
        %1391 = vmatpush2.bf16.msra.mxu0 0
        %1392 = vmatprep.subr.bf16.mxu0 0
        %1393 = vmatpush2.bf16.msra.mxu0 0
        %1394 = vmatprep.subr.bf16.mxu0 0
        %1395 = vmatpush2.bf16.msra.mxu0 0
        %1396 = vmatprep.subr.bf16.mxu0 0
        %1397 = vmatpush2.bf16.msra.mxu0 0
        %1398 = vmatprep.mubr.bf16.mxu0 0
        %1399 = vmatmul.mubr.bf16.gmra.mxu0 %v1242
        %v1400 = vpop.f32.mrf.mxu0
        %v1401 = vadd.f32 %v1279, %v1400
        %v1402 = vpop.f32.mrf.mxu0
        %v1403 = vadd.f32 %v1283, %v1402
        %v1404 = vpop.f32.mrf.mxu0
        %v1405 = vadd.f32 %v1279, %v1404
        %v1406 = vpop.f32.mrf.mxu0
        %v1407 = vadd.f32 %v1283, %v1406
        %1408 = vmatprep.mubr.bf16.mxu0 0
        %1409 = vmatmul.mubr.bf16.gmra.mxu0 %v1243
        %v1410 = vpop.f32.mrf.mxu0
        %v1411 = vadd.f32 %v1279, %v1410
        %v1412 = vpop.f32.mrf.mxu0
        %v1413 = vadd.f32 %v1283, %v1412
        %v1414 = vpop.f32.mrf.mxu0
        %v1415 = vadd.f32 %v1279, %v1414
        %v1416 = vpop.f32.mrf.mxu0
        %v1417 = vadd.f32 %v1283, %v1416
        %1418 = vmatprep.mubr.bf16.mxu0 0
        %1419 = vmatmul.mubr.bf16.gmra.mxu0 %v1244
        %v1420 = vpop.f32.mrf.mxu0
        %v1421 = vadd.f32 %v1279, %v1420
        %v1422 = vpop.f32.mrf.mxu0
        %v1423 = vadd.f32 %v1283, %v1422
        %v1424 = vpop.f32.mrf.mxu0
        %v1425 = vadd.f32 %v1279, %v1424
        %v1426 = vpop.f32.mrf.mxu0
        %v1427 = vadd.f32 %v1283, %v1426
        %1428 = vmatprep.mubr.bf16.mxu0 0
        %1429 = vmatmul.mubr.bf16.gmra.mxu0 %v1245
        %v1430 = vpop.f32.mrf.mxu0
        %v1431 = vadd.f32 %v1279, %v1430
        %v1432 = vpop.f32.mrf.mxu0
        %v1433 = vadd.f32 %v1283, %v1432
        %v1434 = vpop.f32.mrf.mxu0
        %v1435 = vadd.f32 %v1279, %v1434
        %v1436 = vpop.f32.mrf.mxu0
        %v1437 = vadd.f32 %v1283, %v1436
        %1438 = vmatprep.mubr.bf16.mxu0 0
        %1439 = vmatmul.mubr.bf16.gmra.mxu0 %v1246
        %v1440 = vpop.f32.mrf.mxu0
        %v1441 = vadd.f32 %v1279, %v1440
        %v1442 = vpop.f32.mrf.mxu0
        %v1443 = vadd.f32 %v1283, %v1442
        %v1444 = vpop.f32.mrf.mxu0
        %v1445 = vadd.f32 %v1279, %v1444
        %v1446 = vpop.f32.mrf.mxu0
        %v1447 = vadd.f32 %v1283, %v1446
        %1448 = vmatprep.mubr.bf16.mxu0 0
        %1449 = vmatmul.mubr.bf16.gmra.mxu0 %v1247
        %v1450 = vpop.f32.mrf.mxu0
        %v1451 = vadd.f32 %v1279, %v1450
        %v1452 = vpop.f32.mrf.mxu0
        %v1453 = vadd.f32 %v1283, %v1452
        %v1454 = vpop.f32.mrf.mxu0
        %v1455 = vadd.f32 %v1279, %v1454
        %v1456 = vpop.f32.mrf.mxu0
        %v1457 = vadd.f32 %v1283, %v1456
        %1458 = vmatprep.mubr.bf16.mxu0 0
        %1459 = vmatmul.mubr.bf16.gmra.mxu0 %v1248
        %v1460 = vpop.f32.mrf.mxu0
        %v1461 = vadd.f32 %v1279, %v1460
        %v1462 = vpop.f32.mrf.mxu0
        %v1463 = vadd.f32 %v1283, %v1462
        %v1464 = vpop.f32.mrf.mxu0
        %v1465 = vadd.f32 %v1279, %v1464
        %v1466 = vpop.f32.mrf.mxu0
        %v1467 = vadd.f32 %v1283, %v1466
        %1468 = vmatprep.mubr.bf16.mxu0 0
        %1469 = vmatmul.mubr.bf16.gmra.mxu0 %v1249
        %v1470 = vpop.f32.mrf.mxu0
        %v1471 = vadd.f32 %v1279, %v1470
        %v1472 = vpop.f32.mrf.mxu0
        %v1473 = vadd.f32 %v1283, %v1472
        %v1474 = vpop.f32.mrf.mxu0
        %v1475 = vadd.f32 %v1279, %v1474
        %v1476 = vpop.f32.mrf.mxu0
        %v1477 = vadd.f32 %v1283, %v1476
        %1478 = vmatprep.mubr.bf16.mxu0 0
        %1479 = vmatmul.mubr.bf16.gmra.mxu0 %v1250
        %v1480 = vpop.f32.mrf.mxu0
        %v1481 = vadd.f32 %v1279, %v1480
        %v1482 = vpop.f32.mrf.mxu0
        %v1483 = vadd.f32 %v1283, %v1482
        %v1484 = vpop.f32.mrf.mxu0
        %v1485 = vadd.f32 %v1279, %v1484
        %v1486 = vpop.f32.mrf.mxu0
        %v1487 = vadd.f32 %v1283, %v1486
        %1488 = vmatprep.mubr.bf16.mxu0 0
        %1489 = vmatmul.mubr.bf16.gmra.mxu0 %v1251
        %v1490 = vpop.f32.mrf.mxu0
        %v1491 = vadd.f32 %v1279, %v1490
        %v1492 = vpop.f32.mrf.mxu0
        %v1493 = vadd.f32 %v1283, %v1492
        %v1494 = vpop.f32.mrf.mxu0
        %v1495 = vadd.f32 %v1279, %v1494
        %v1496 = vpop.f32.mrf.mxu0
        %v1497 = vadd.f32 %v1283, %v1496
        %1498 = vmatprep.mubr.bf16.mxu0 0
        %1499 = vmatmul.mubr.bf16.gmra.mxu0 %v1252
        %v1500 = vpop.f32.mrf.mxu0
        %v1501 = vadd.f32 %v1279, %v1500
        %v1502 = vpop.f32.mrf.mxu0
        %v1503 = vadd.f32 %v1283, %v1502
        %v1504 = vpop.f32.mrf.mxu0
        %v1505 = vadd.f32 %v1279, %v1504
        %v1506 = vpop.f32.mrf.mxu0
        %v1507 = vadd.f32 %v1283, %v1506
        %1508 = vmatprep.mubr.bf16.mxu0 0
        %1509 = vmatmul.mubr.bf16.gmra.mxu0 %v1253
        %v1510 = vpop.f32.mrf.mxu0
        %v1511 = vadd.f32 %v1279, %v1510
        %v1512 = vpop.f32.mrf.mxu0
        %v1513 = vadd.f32 %v1283, %v1512
        %v1514 = vpop.f32.mrf.mxu0
        %v1515 = vadd.f32 %v1279, %v1514
        %v1516 = vpop.f32.mrf.mxu0
        %v1517 = vadd.f32 %v1283, %v1516
        %1518 = vmatprep.mubr.bf16.mxu0 0
        %1519 = vmatmul.mubr.bf16.gmra.mxu0 %v1254
        %v1520 = vpop.f32.mrf.mxu0
        %v1521 = vadd.f32 %v1279, %v1520
        %v1522 = vpop.f32.mrf.mxu0
        %v1523 = vadd.f32 %v1283, %v1522
        %v1524 = vpop.f32.mrf.mxu0
        %v1525 = vadd.f32 %v1279, %v1524
        %v1526 = vpop.f32.mrf.mxu0
        %v1527 = vadd.f32 %v1283, %v1526
        %1528 = vmatprep.mubr.bf16.mxu0 0
        %1529 = vmatmul.mubr.bf16.gmra.mxu0 %v1255
        %v1530 = vpop.f32.mrf.mxu0
        %v1531 = vadd.f32 %v1279, %v1530
        %v1532 = vpop.f32.mrf.mxu0
        %v1533 = vadd.f32 %v1283, %v1532
        %v1534 = vpop.f32.mrf.mxu0
        %v1535 = vadd.f32 %v1279, %v1534
        %v1536 = vpop.f32.mrf.mxu0
        %v1537 = vadd.f32 %v1283, %v1536
        %1538 = vmatprep.mubr.bf16.mxu0 0
        %1539 = vmatmul.mubr.bf16.gmra.mxu0 %v1256
        %v1540 = vpop.f32.mrf.mxu0
        %v1541 = vadd.f32 %v1279, %v1540
        %v1542 = vpop.f32.mrf.mxu0
        %v1543 = vadd.f32 %v1283, %v1542
        %v1544 = vpop.f32.mrf.mxu0
        %v1545 = vadd.f32 %v1279, %v1544
        %v1546 = vpop.f32.mrf.mxu0
        %v1547 = vadd.f32 %v1283, %v1546
        %1548 = vmatprep.mubr.bf16.mxu0 0
        %1549 = vmatmul.mubr.bf16.gmra.mxu0 %v1257
        %v1550 = vpop.f32.mrf.mxu0
        %v1551 = vadd.f32 %v1279, %v1550
        %v1552 = vpop.f32.mrf.mxu0
        %v1553 = vadd.f32 %v1283, %v1552
        %v1554 = vpop.f32.mrf.mxu0
        %v1555 = vadd.f32 %v1279, %v1554
        %v1556 = vpop.f32.mrf.mxu0
        %v1557 = vadd.f32 %v1283, %v1556
        %1558 = vdwg.mxu0
        %v1559 = vlaneseq
        %v1560 = vshrl.u32 %v1559, 7
        %v1561 = vadd.s32 %v1560, 8
        %v1562 = vadd.s32 %v1560, 16
        %v1563 = vadd.s32 %v1560, 24
        %s1564 = smul.u32 %s30, 32
        %s1565 = ssub.s32 50, %s1564
        %v1566 = vstv %s1565
        %vm1567 = vcmp.lt.s32.totalorder %v1560, %v1566
        %vm1568 = vcmp.lt.s32.totalorder %v1561, %v1566
        %vm1569 = vcmp.lt.s32.totalorder %v1562, %v1566
        %vm1570 = vcmp.lt.s32.totalorder %v1563, %v1566
        %v1571 = vsel %vm1567, %v1401, -inf
        %v1572 = vsel %vm1567, %v1403, -inf
        %v1573 = vsel %vm1568, %v1405, -inf
        %v1574 = vsel %vm1568, %v1407, -inf
        %v1575 = vsel %vm1569, %v1411, -inf
        %v1576 = vsel %vm1569, %v1413, -inf
        %v1577 = vsel %vm1570, %v1415, -inf
        %v1578 = vsel %vm1570, %v1417, -inf
        %v1579 = vsel %vm1567, %v1421, -inf
        %v1580 = vsel %vm1567, %v1423, -inf
        %v1581 = vsel %vm1568, %v1425, -inf
        %v1582 = vsel %vm1568, %v1427, -inf
        %v1583 = vsel %vm1569, %v1431, -inf
        %v1584 = vsel %vm1569, %v1433, -inf
        %v1585 = vsel %vm1570, %v1435, -inf
        %v1586 = vsel %vm1570, %v1437, -inf
        %v1587 = vsel %vm1567, %v1441, -inf
        %v1588 = vsel %vm1567, %v1443, -inf
        %v1589 = vsel %vm1568, %v1445, -inf
        %v1590 = vsel %vm1568, %v1447, -inf
        %v1591 = vsel %vm1569, %v1451, -inf
        %v1592 = vsel %vm1569, %v1453, -inf
        %v1593 = vsel %vm1570, %v1455, -inf
        %v1594 = vsel %vm1570, %v1457, -inf
        %v1595 = vsel %vm1567, %v1461, -inf
        %v1596 = vsel %vm1567, %v1463, -inf
        %v1597 = vsel %vm1568, %v1465, -inf
        %v1598 = vsel %vm1568, %v1467, -inf
        %v1599 = vsel %vm1569, %v1471, -inf
        %v1600 = vsel %vm1569, %v1473, -inf
        %v1601 = vsel %vm1570, %v1475, -inf
        %v1602 = vsel %vm1570, %v1477, -inf
        %v1603 = vsel %vm1567, %v1481, -inf
        %v1604 = vsel %vm1567, %v1483, -inf
        %v1605 = vsel %vm1568, %v1485, -inf
        %v1606 = vsel %vm1568, %v1487, -inf
        %v1607 = vsel %vm1569, %v1491, -inf
        %v1608 = vsel %vm1569, %v1493, -inf
        %v1609 = vsel %vm1570, %v1495, -inf
        %v1610 = vsel %vm1570, %v1497, -inf
        %v1611 = vsel %vm1567, %v1501, -inf
        %v1612 = vsel %vm1567, %v1503, -inf
        %v1613 = vsel %vm1568, %v1505, -inf
        %v1614 = vsel %vm1568, %v1507, -inf
        %v1615 = vsel %vm1569, %v1511, -inf
        %v1616 = vsel %vm1569, %v1513, -inf
        %v1617 = vsel %vm1570, %v1515, -inf
        %v1618 = vsel %vm1570, %v1517, -inf
        %v1619 = vsel %vm1567, %v1521, -inf
        %v1620 = vsel %vm1567, %v1523, -inf
        %v1621 = vsel %vm1568, %v1525, -inf
        %v1622 = vsel %vm1568, %v1527, -inf
        %v1623 = vsel %vm1569, %v1531, -inf
        %v1624 = vsel %vm1569, %v1533, -inf
        %v1625 = vsel %vm1570, %v1535, -inf
        %v1626 = vsel %vm1570, %v1537, -inf
        %v1627 = vsel %vm1567, %v1541, -inf
        %v1628 = vsel %vm1567, %v1543, -inf
        %v1629 = vsel %vm1568, %v1545, -inf
        %v1630 = vsel %vm1568, %v1547, -inf
        %v1631 = vsel %vm1569, %v1551, -inf
        %v1632 = vsel %vm1569, %v1553, -inf
        %v1633 = vsel %vm1570, %v1555, -inf
        %v1634 = vsel %vm1570, %v1557, -inf
        %v1635 = vld [vmem:[#allocation2] sm:$0xff]
        %v1636 = vld [vmem:[#allocation2 + $0x8] sm:$0xff]
        %v1637 = vmax.f32 %v1571, %v1573
        %v1638 = vmax.f32 %v1637, %v1575
        %v1639 = vmax.f32 %v1638, %v1577
        %v1640 = vrot.slane %v1639, 4
        %v1641 = vmax.f32 %v1639, %v1640
        %v1642 = vrot.slane %v1641, 2
        %v1643 = vmax.f32 %v1641, %v1642
        %v1644 = vrot.slane %v1643, 1
        %v1645 = vmax.f32 %v1643, %v1644
        %v1646 = vmax.f32 %v1572, %v1574
        %v1647 = vmax.f32 %v1646, %v1576
        %v1648 = vmax.f32 %v1647, %v1578
        %v1649 = vrot.slane %v1648, 4
        %v1650 = vmax.f32 %v1648, %v1649
        %v1651 = vrot.slane %v1650, 2
        %v1652 = vmax.f32 %v1650, %v1651
        %v1653 = vrot.slane %v1652, 1
        %v1654 = vmax.f32 %v1652, %v1653
        %v1655 = vmax.f32 %v1579, %v1581
        %v1656 = vmax.f32 %v1655, %v1583
        %v1657 = vmax.f32 %v1656, %v1585
        %v1658 = vrot.slane %v1657, 4
        %v1659 = vmax.f32 %v1657, %v1658
        %v1660 = vrot.slane %v1659, 2
        %v1661 = vmax.f32 %v1659, %v1660
        %v1662 = vrot.slane %v1661, 1
        %v1663 = vmax.f32 %v1661, %v1662
        %v1664 = vmax.f32 %v1580, %v1582
        %v1665 = vmax.f32 %v1664, %v1584
        %v1666 = vmax.f32 %v1665, %v1586
        %v1667 = vrot.slane %v1666, 4
        %v1668 = vmax.f32 %v1666, %v1667
        %v1669 = vrot.slane %v1668, 2
        %v1670 = vmax.f32 %v1668, %v1669
        %v1671 = vrot.slane %v1670, 1
        %v1672 = vmax.f32 %v1670, %v1671
        %v1673 = vmax.f32 %v1587, %v1589
        %v1674 = vmax.f32 %v1673, %v1591
        %v1675 = vmax.f32 %v1674, %v1593
        %v1676 = vrot.slane %v1675, 4
        %v1677 = vmax.f32 %v1675, %v1676
        %v1678 = vrot.slane %v1677, 2
        %v1679 = vmax.f32 %v1677, %v1678
        %v1680 = vrot.slane %v1679, 1
        %v1681 = vmax.f32 %v1679, %v1680
        %v1682 = vmax.f32 %v1588, %v1590
        %v1683 = vmax.f32 %v1682, %v1592
        %v1684 = vmax.f32 %v1683, %v1594
        %v1685 = vrot.slane %v1684, 4
        %v1686 = vmax.f32 %v1684, %v1685
        %v1687 = vrot.slane %v1686, 2
        %v1688 = vmax.f32 %v1686, %v1687
        %v1689 = vrot.slane %v1688, 1
        %v1690 = vmax.f32 %v1688, %v1689
        %v1691 = vmax.f32 %v1595, %v1597
        %v1692 = vmax.f32 %v1691, %v1599
        %v1693 = vmax.f32 %v1692, %v1601
        %v1694 = vrot.slane %v1693, 4
        %v1695 = vmax.f32 %v1693, %v1694
        %v1696 = vrot.slane %v1695, 2
        %v1697 = vmax.f32 %v1695, %v1696
        %v1698 = vrot.slane %v1697, 1
        %v1699 = vmax.f32 %v1697, %v1698
        %v1700 = vmax.f32 %v1596, %v1598
        %v1701 = vmax.f32 %v1700, %v1600
        %v1702 = vmax.f32 %v1701, %v1602
        %v1703 = vrot.slane %v1702, 4
        %v1704 = vmax.f32 %v1702, %v1703
        %v1705 = vrot.slane %v1704, 2
        %v1706 = vmax.f32 %v1704, %v1705
        %v1707 = vrot.slane %v1706, 1
        %v1708 = vmax.f32 %v1706, %v1707
        %v1709 = vmax.f32 %v1603, %v1605
        %v1710 = vmax.f32 %v1709, %v1607
        %v1711 = vmax.f32 %v1710, %v1609
        %v1712 = vrot.slane %v1711, 4
        %v1713 = vmax.f32 %v1711, %v1712
        %v1714 = vrot.slane %v1713, 2
        %v1715 = vmax.f32 %v1713, %v1714
        %v1716 = vrot.slane %v1715, 1
        %v1717 = vmax.f32 %v1715, %v1716
        %v1718 = vmax.f32 %v1604, %v1606
        %v1719 = vmax.f32 %v1718, %v1608
        %v1720 = vmax.f32 %v1719, %v1610
        %v1721 = vrot.slane %v1720, 4
        %v1722 = vmax.f32 %v1720, %v1721
        %v1723 = vrot.slane %v1722, 2
        %v1724 = vmax.f32 %v1722, %v1723
        %v1725 = vrot.slane %v1724, 1
        %v1726 = vmax.f32 %v1724, %v1725
        %v1727 = vmax.f32 %v1611, %v1613
        %v1728 = vmax.f32 %v1727, %v1615
        %v1729 = vmax.f32 %v1728, %v1617
        %v1730 = vrot.slane %v1729, 4
        %v1731 = vmax.f32 %v1729, %v1730
        %v1732 = vrot.slane %v1731, 2
        %v1733 = vmax.f32 %v1731, %v1732
        %v1734 = vrot.slane %v1733, 1
        %v1735 = vmax.f32 %v1733, %v1734
        %v1736 = vmax.f32 %v1612, %v1614
        %v1737 = vmax.f32 %v1736, %v1616
        %v1738 = vmax.f32 %v1737, %v1618
        %v1739 = vrot.slane %v1738, 4
        %v1740 = vmax.f32 %v1738, %v1739
        %v1741 = vrot.slane %v1740, 2
        %v1742 = vmax.f32 %v1740, %v1741
        %v1743 = vrot.slane %v1742, 1
        %v1744 = vmax.f32 %v1742, %v1743
        %v1745 = vmax.f32 %v1619, %v1621
        %v1746 = vmax.f32 %v1745, %v1623
        %v1747 = vmax.f32 %v1746, %v1625
        %v1748 = vrot.slane %v1747, 4
        %v1749 = vmax.f32 %v1747, %v1748
        %v1750 = vrot.slane %v1749, 2
        %v1751 = vmax.f32 %v1749, %v1750
        %v1752 = vrot.slane %v1751, 1
        %v1753 = vmax.f32 %v1751, %v1752
        %v1754 = vmax.f32 %v1620, %v1622
        %v1755 = vmax.f32 %v1754, %v1624
        %v1756 = vmax.f32 %v1755, %v1626
        %v1757 = vrot.slane %v1756, 4
        %v1758 = vmax.f32 %v1756, %v1757
        %v1759 = vrot.slane %v1758, 2
        %v1760 = vmax.f32 %v1758, %v1759
        %v1761 = vrot.slane %v1760, 1
        %v1762 = vmax.f32 %v1760, %v1761
        %v1763 = vmax.f32 %v1627, %v1629
        %v1764 = vmax.f32 %v1763, %v1631
        %v1765 = vmax.f32 %v1764, %v1633
        %v1766 = vrot.slane %v1765, 4
        %v1767 = vmax.f32 %v1765, %v1766
        %v1768 = vrot.slane %v1767, 2
        %v1769 = vmax.f32 %v1767, %v1768
        %v1770 = vrot.slane %v1769, 1
        %v1771 = vmax.f32 %v1769, %v1770
        %v1772 = vmax.f32 %v1628, %v1630
        %v1773 = vmax.f32 %v1772, %v1632
        %v1774 = vmax.f32 %v1773, %v1634
        %v1775 = vrot.slane %v1774, 4
        %v1776 = vmax.f32 %v1774, %v1775
        %v1777 = vrot.slane %v1776, 2
        %v1778 = vmax.f32 %v1776, %v1777
        %v1779 = vrot.slane %v1778, 1
        %v1780 = vmax.f32 %v1778, %v1779
        %vm1797 = vcmask 1041409
        %v1798 = vsel %vm1797, %v1663, %v1645
        %vm1799 = vcmask 1042434
        %v1800 = vsel %vm1799, %v1681, %v1798
        %vm1801 = vcmask 1043459
        %v1802 = vsel %vm1801, %v1699, %v1800
        %vm1803 = vcmask 1044484
        %v1804 = vsel %vm1803, %v1717, %v1802
        %vm1805 = vcmask 1045509
        %v1806 = vsel %vm1805, %v1735, %v1804
        %vm1807 = vcmask 1046534
        %v1808 = vsel %vm1807, %v1753, %v1806
        %vm1809 = vcmask 1047559
        %v1810 = vsel %vm1809, %v1771, %v1808
        %v1811 = vsel %vm1797, %v1672, %v1654
        %v1812 = vsel %vm1799, %v1690, %v1811
        %v1813 = vsel %vm1801, %v1708, %v1812
        %v1814 = vsel %vm1803, %v1726, %v1813
        %v1815 = vsel %vm1805, %v1744, %v1814
        %v1816 = vsel %vm1807, %v1762, %v1815
        %v1817 = vsel %vm1809, %v1780, %v1816
        %v1820 = vmax.f32 %v1635, %v1810
        %v1821 = vmax.f32 %v1636, %v1817
        %1822 = vst [vmem:[#allocation2] sm:$0xff] %v1820
        %1823 = vst [vmem:[#allocation2 + $0x8] sm:$0xff] %v1821
        %p1824 = scmp.eq.s32.totalorder %s30, 1
        // Predicated region
        $region110: #{tpu_custom_call.1} parent=100 // pred_check
          %p1825 = pneg %p1824
        $region111: #{tpu_custom_call.1} parent=100 // pred_check_branch
          %1827 = sbr.rel (%p1825) target = $region113
        $region112: #{tpu_custom_call.1} parent=100 // pred_region
          %v1828 = vld [vmem:[#allocation2] sm:$0xff]
          %v1829 = vld [vmem:[#allocation2 + $0x8] sm:$0xff]
          %v1830 = vpack.c.bf16 %v1828, %v1828
          %v1831 = vpack.c.bf16 %v1829, %v1829
          %v1832 = vld [vmem:[%s7] sm:$0xf]
          %v1833 = vld [vmem:[%s7 + $0x4] sm:$0xf]
          %v1834 = vld [vmem:[%s7 + $0x8] sm:$0xf]
          %v1835 = vld [vmem:[%s7 + $0xc] sm:$0xf]
          %v1836 = vld [vmem:[%s7 + $0x10] sm:$0xf]
          %v1837 = vld [vmem:[%s7 + $0x14] sm:$0xf]
          %v1838 = vld [vmem:[%s7 + $0x18] sm:$0xf]
          %v1839 = vld [vmem:[%s7 + $0x1c] sm:$0xf]
          %v1840 = vld [vmem:[%s7 + $0x20] sm:$0xf]
          %v1841 = vld [vmem:[%s7 + $0x24] sm:$0xf]
          %v1842 = vld [vmem:[%s7 + $0x28] sm:$0xf]
          %v1843 = vld [vmem:[%s7 + $0x2c] sm:$0xf]
          %v1844 = vld [vmem:[%s7 + $0x30] sm:$0xf]
          %v1845 = vld [vmem:[%s7 + $0x34] sm:$0xf]
          %v1846 = vld [vmem:[%s7 + $0x38] sm:$0xf]
          %v1847 = vld [vmem:[%s7 + $0x3c] sm:$0xf]
          %v1848 = vld [vmem:[%s7 + $0x40] sm:$0xf]
          %v1849 = vld [vmem:[%s7 + $0x44] sm:$0xf]
          %v1850 = vld [vmem:[%s7 + $0x48] sm:$0xf]
          %v1851 = vld [vmem:[%s7 + $0x4c] sm:$0xf]
          %v1852 = vld [vmem:[%s7 + $0x50] sm:$0xf]
          %v1853 = vld [vmem:[%s7 + $0x54] sm:$0xf]
          %v1854 = vld [vmem:[%s7 + $0x58] sm:$0xf]
          %v1855 = vld [vmem:[%s7 + $0x5c] sm:$0xf]
          %v1856 = vld [vmem:[%s7 + $0x60] sm:$0xf]
          %v1857 = vld [vmem:[%s7 + $0x64] sm:$0xf]
          %v1858 = vld [vmem:[%s7 + $0x68] sm:$0xf]
          %v1859 = vld [vmem:[%s7 + $0x6c] sm:$0xf]
          %v1860 = vld [vmem:[%s7 + $0x70] sm:$0xf]
          %v1861 = vld [vmem:[%s7 + $0x74] sm:$0xf]
          %v1862 = vld [vmem:[%s7 + $0x78] sm:$0xf]
          %v1863 = vld [vmem:[%s7 + $0x7c] sm:$0xf]
          %v1864 = vld [vmem:[%s8] sm:$0x1]
          %v1866 = vlaneseq
          %v1867 = vshrl.u32 %v1866, 7
          %v1868 = vsub.s32 0, %v1867
          %v1869 = vrot.slane %v1864, %v1868
          %v1903 = vunpack.c.l.b16 %v1832
          %v1904 = vunpack.c.l.b16 %v1833
          %v1905 = vunpack.c.l.b16 %v1834
          %v1906 = vunpack.c.l.b16 %v1835
          %v1907 = vunpack.c.l.b16 %v1836
          %v1908 = vunpack.c.l.b16 %v1837
          %v1909 = vunpack.c.l.b16 %v1838
          %v1910 = vunpack.c.l.b16 %v1839
          %v1911 = vunpack.c.l.b16 %v1840
          %v1912 = vunpack.c.l.b16 %v1841
          %v1913 = vunpack.c.l.b16 %v1842
          %v1914 = vunpack.c.l.b16 %v1843
          %v1915 = vunpack.c.l.b16 %v1844
          %v1916 = vunpack.c.l.b16 %v1845
          %v1917 = vunpack.c.l.b16 %v1846
          %v1918 = vunpack.c.l.b16 %v1847
          %v1919 = vunpack.c.l.b16 %v1848
          %v1920 = vunpack.c.l.b16 %v1849
          %v1921 = vunpack.c.l.b16 %v1850
          %v1922 = vunpack.c.l.b16 %v1851
          %v1923 = vunpack.c.l.b16 %v1852
          %v1924 = vunpack.c.l.b16 %v1853
          %v1925 = vunpack.c.l.b16 %v1854
          %v1926 = vunpack.c.l.b16 %v1855
          %v1927 = vunpack.c.l.b16 %v1856
          %v1928 = vunpack.c.l.b16 %v1857
          %v1929 = vunpack.c.l.b16 %v1858
          %v1930 = vunpack.c.l.b16 %v1859
          %v1931 = vunpack.c.l.b16 %v1860
          %v1932 = vunpack.c.l.b16 %v1861
          %v1933 = vunpack.c.l.b16 %v1862
          %v1934 = vunpack.c.l.b16 %v1863
          %v1935 = vpack.c.b16 %v1904, %v1903
          %v1936 = vpack.c.b16 %v1906, %v1905
          %v1937 = vpack.c.b16 %v1908, %v1907
          %v1938 = vpack.c.b16 %v1910, %v1909
          %v1939 = vpack.c.b16 %v1912, %v1911
          %v1940 = vpack.c.b16 %v1914, %v1913
          %v1941 = vpack.c.b16 %v1916, %v1915
          %v1942 = vpack.c.b16 %v1918, %v1917
          %v1943 = vpack.c.b16 %v1920, %v1919
          %v1944 = vpack.c.b16 %v1922, %v1921
          %v1945 = vpack.c.b16 %v1924, %v1923
          %v1946 = vpack.c.b16 %v1926, %v1925
          %v1947 = vpack.c.b16 %v1928, %v1927
          %v1948 = vpack.c.b16 %v1930, %v1929
          %v1949 = vpack.c.b16 %v1932, %v1931
          %v1950 = vpack.c.b16 %v1934, %v1933
          %1967 = vmatprep.subr.bf16.mxu0 0
          %1968 = vmatpush1.bf16.msra.mxu0 %v1942
          %1969 = vmatprep.subr.bf16.mxu0 0
          %1970 = vmatpush1.bf16.msra.mxu0 %v1941
          %1971 = vmatprep.subr.bf16.mxu0 0
          %1972 = vmatpush1.bf16.msra.mxu0 %v1940
          %1973 = vmatprep.subr.bf16.mxu0 0
          %1974 = vmatpush1.bf16.msra.mxu0 %v1939
          %1975 = vmatprep.subr.bf16.mxu0 0
          %1976 = vmatpush1.bf16.msra.mxu0 %v1938
          %1977 = vmatprep.subr.bf16.mxu0 0
          %1978 = vmatpush1.bf16.msra.mxu0 %v1937
          %1979 = vmatprep.subr.bf16.mxu0 0
          %1980 = vmatpush1.bf16.msra.mxu0 %v1936
          %1981 = vmatprep.subr.bf16.mxu0 0
          %1982 = vmatpush1.bf16.msra.mxu0 %v1935
          %1983 = vmatprep.subr.bf16.mxu0 0
          %1984 = vmatpush2.bf16.msra.mxu0 %v1950
          %1985 = vmatprep.subr.bf16.mxu0 0
          %1986 = vmatpush2.bf16.msra.mxu0 %v1949
          %1987 = vmatprep.subr.bf16.mxu0 0
          %1988 = vmatpush2.bf16.msra.mxu0 %v1948
          %1989 = vmatprep.subr.bf16.mxu0 0
          %1990 = vmatpush2.bf16.msra.mxu0 %v1947
          %1991 = vmatprep.subr.bf16.mxu0 0
          %1992 = vmatpush2.bf16.msra.mxu0 %v1946
          %1993 = vmatprep.subr.bf16.mxu0 0
          %1994 = vmatpush2.bf16.msra.mxu0 %v1945
          %1995 = vmatprep.subr.bf16.mxu0 0
          %1996 = vmatpush2.bf16.msra.mxu0 %v1944
          %1997 = vmatprep.subr.bf16.mxu0 0
          %1998 = vmatpush2.bf16.msra.mxu0 %v1943
          %1999 = vmatprep.mubr.bf16.mxu0 %v1831
          %2000 = vmatmul.mubr.bf16.gmra.mxu0 %v1830
          %v2001 = vpop.f32.mrf.mxu0
          %v2002 = vadd.f32 %v1869, %v2001
          %v2003 = vpop.f32.mrf.mxu0
          %v2004 = vpop.f32.mrf.mxu0
          %v2005 = vpop.f32.mrf.mxu0
          %2006 = vdwg.mxu0
          %v2007 = vmax.f32 %v2002, 0.0
          %v2008 = vpack.c.bf16 %v2007, %v2007
          %v2009 = vld [vmem:[%s9] sm:$0xf]
          %v2010 = vld [vmem:[%s9 + $0x4] sm:$0xf]
          %v2011 = vld [vmem:[%s9 + $0x8] sm:$0xf]
          %v2012 = vld [vmem:[%s9 + $0xc] sm:$0xf]
          %v2013 = vld [vmem:[%s9 + $0x10] sm:$0xf]
          %v2014 = vld [vmem:[%s9 + $0x14] sm:$0xf]
          %v2015 = vld [vmem:[%s9 + $0x18] sm:$0xf]
          %v2016 = vld [vmem:[%s9 + $0x1c] sm:$0xf]
          %v2017 = vld [vmem:[%s9 + $0x20] sm:$0xf]
          %v2018 = vld [vmem:[%s9 + $0x24] sm:$0xf]
          %v2019 = vld [vmem:[%s9 + $0x28] sm:$0xf]
          %v2020 = vld [vmem:[%s9 + $0x2c] sm:$0xf]
          %v2021 = vld [vmem:[%s9 + $0x30] sm:$0xf]
          %v2022 = vld [vmem:[%s9 + $0x34] sm:$0xf]
          %v2023 = vld [vmem:[%s9 + $0x38] sm:$0xf]
          %v2024 = vld [vmem:[%s9 + $0x3c] sm:$0xf]
          %v2025 = vld [vmem:[%s10] sm:$0x1]
          %v2027 = vlaneseq
          %v2028 = vshrl.u32 %v2027, 7
          %v2029 = vsub.s32 0, %v2028
          %v2030 = vrot.slane %v2025, %v2029
          %v2048 = vunpack.c.l.b16 %v2009
          %v2049 = vunpack.c.l.b16 %v2010
          %v2050 = vunpack.c.l.b16 %v2011
          %v2051 = vunpack.c.l.b16 %v2012
          %v2052 = vunpack.c.l.b16 %v2013
          %v2053 = vunpack.c.l.b16 %v2014
          %v2054 = vunpack.c.l.b16 %v2015
          %v2055 = vunpack.c.l.b16 %v2016
          %v2056 = vunpack.c.l.b16 %v2017
          %v2057 = vunpack.c.l.b16 %v2018
          %v2058 = vunpack.c.l.b16 %v2019
          %v2059 = vunpack.c.l.b16 %v2020
          %v2060 = vunpack.c.l.b16 %v2021
          %v2061 = vunpack.c.l.b16 %v2022
          %v2062 = vunpack.c.l.b16 %v2023
          %v2063 = vunpack.c.l.b16 %v2024
          %v2064 = vpack.c.b16 %v2049, %v2048
          %v2065 = vpack.c.b16 %v2051, %v2050
          %v2066 = vpack.c.b16 %v2053, %v2052
          %v2067 = vpack.c.b16 %v2055, %v2054
          %v2068 = vpack.c.b16 %v2057, %v2056
          %v2069 = vpack.c.b16 %v2059, %v2058
          %v2070 = vpack.c.b16 %v2061, %v2060
          %v2071 = vpack.c.b16 %v2063, %v2062
          %2080 = vmatprep.subr.bf16.mxu0 0
          %2081 = vmatpush1.bf16.msra.mxu0 %v2071
          %2082 = vmatprep.subr.bf16.mxu0 0
          %2083 = vmatpush1.bf16.msra.mxu0 %v2070
          %2084 = vmatprep.subr.bf16.mxu0 0
          %2085 = vmatpush1.bf16.msra.mxu0 %v2069
          %2086 = vmatprep.subr.bf16.mxu0 0
          %2087 = vmatpush1.bf16.msra.mxu0 %v2068
          %2088 = vmatprep.subr.bf16.mxu0 0
          %2089 = vmatpush1.bf16.msra.mxu0 %v2067
          %2090 = vmatprep.subr.bf16.mxu0 0
          %2091 = vmatpush1.bf16.msra.mxu0 %v2066
          %2092 = vmatprep.subr.bf16.mxu0 0
          %2093 = vmatpush1.bf16.msra.mxu0 %v2065
          %2094 = vmatprep.subr.bf16.mxu0 0
          %2095 = vmatpush1.bf16.msra.mxu0 %v2064
          %2096 = vmatprep.subr.bf16.mxu0 0
          %2097 = vmatpush2.bf16.msra.mxu0 0
          %2098 = vmatprep.subr.bf16.mxu0 0
          %2099 = vmatpush2.bf16.msra.mxu0 0
          %2100 = vmatprep.subr.bf16.mxu0 0
          %2101 = vmatpush2.bf16.msra.mxu0 0
          %2102 = vmatprep.subr.bf16.mxu0 0
          %2103 = vmatpush2.bf16.msra.mxu0 0
          %2104 = vmatprep.subr.bf16.mxu0 0
          %2105 = vmatpush2.bf16.msra.mxu0 0
          %2106 = vmatprep.subr.bf16.mxu0 0
          %2107 = vmatpush2.bf16.msra.mxu0 0
          %2108 = vmatprep.subr.bf16.mxu0 0
          %2109 = vmatpush2.bf16.msra.mxu0 0
          %2110 = vmatprep.subr.bf16.mxu0 0
          %2111 = vmatpush2.bf16.msra.mxu0 0
          %2112 = vmatprep.mubr.bf16.mxu0 0
          %2113 = vmatmul.mubr.bf16.gmra.mxu0 %v2008
          %v2114 = vpop.f32.mrf.mxu0
          %v2115 = vadd.f32 %v2030, %v2114
          %v2116 = vpop.f32.mrf.mxu0
          %v2117 = vpop.f32.mrf.mxu0
          %v2118 = vpop.f32.mrf.mxu0
          %2119 = vdwg.mxu0
          %2120 = vst [vmem:[%s569] sm:$0xff] %v2115
        $region113: #{tpu_custom_call.1} parent=100 // pred_fallthru
          _
        %s2121 = sand.u32 %s283, 1
        %s2122 = scalar_lea.sflag [#allocation5], %s2121
        %s2123 = sand.u32 %s283, 1
        %s2124 = smul.addr %s2123, 8
        %s2125 = scalar_lea.vmem [#allocation4], %s2124
        // Predicated region
        $region114: #{tpu_custom_call.1} parent=100 // pred_check
          %p2126 = pneg %p293
        $region115: #{tpu_custom_call.1} parent=100 // pred_check_branch
          %2128 = sbr.rel (%p2126) target = $region117
        $region116: #{tpu_custom_call.1} parent=100 // pred_region
          %s2130 = ssub.s32 128, 128
          %2131 = vsyncadd %s2122, %s2130
          %s2132 = smul.addr %s29, 128
          %s2133 = scalar_lea.hbm %s11, %s2132
          %s2135 = sshll.u32 %s2125, 4
          %s2136 = int_to_ptr.vmem [resolvable:$true] %s2135
          %2138 = dma.vmem_to_hbm [thread:$0]  %s2136, 128, %s2133, %s2122
        $region117: #{tpu_custom_call.1} parent=100 // pred_fallthru
          _
      $region101: #{tpu_custom_call.1} parent=5 // pred_fallthru
        _
      %p2139 = scmp.le.s32.totalorder 2, %s20
      // Predicated region
      $region118: #{tpu_custom_call.1} parent=5 // pred_check
        %p2140 = pneg %p2139
      $region119: #{tpu_custom_call.1} parent=5 // pred_check_branch
        %2142 = sbr.rel (%p2140) target = $region121
      $region120: #{tpu_custom_call.1} parent=5 // pred_region
        %s2143 = ssub.s32 %s20, 2
        // Predicated region
        $region122: #{tpu_custom_call.1} parent=120 // pred_check
          %p2144 = pneg %p299
        $region123: #{tpu_custom_call.1} parent=120 // pred_check_branch
          %2146 = sbr.rel (%p2144) target = $region125
        $region124: #{tpu_custom_call.1} parent=120 // pred_region
          %s2147 = sand.u32 %s284, 1
          %s2148 = scalar_lea.sflag [#allocation5], %s2147
          %s2149 = sand.u32 %s284, 1
          %s2150 = smul.addr %s2149, 8
          %s2151 = scalar_lea.vmem [#allocation4], %s2150
          %2152 = dma.done %s2148, 128
        $region125: #{tpu_custom_call.1} parent=120 // pred_fallthru
          _
      $region121: #{tpu_custom_call.1} parent=5 // pred_fallthru
        _
    $region6: #{tpu_custom_call.1} parent=1 // loop_footer
      %s24 = sadd.s32 1, %s20
    $region7: #{tpu_custom_call.1} parent=1 // loop_footer_branch
      %19 = sbr.rel target = $region3
    $region8: #{tpu_custom_call.1} parent=1 // loop_exit
      _
    %2153 = vsyncpa [#allocation5], 1
    %s2154 = scalar_lea.sflag [#allocation5], 1
    %2155 = vsyncpa %s2154, 1

</llo_original>
